<compile_context>
chip_gen: v7x
topology: tpu7x:2x2x1
jax: 0.10.0
libtpu: 0.0.40
codegen_flags: <defaults>
</compile_context>

<pallas_src>
import functools

import jax
import jax.numpy as jnp
from jax.experimental import pallas as pl
from jax.experimental.pallas import tpu as pltpu

# ---- model hyper-parameters (consistent with the module's __init__) ----
INPUT_DIM = 13          # per-agent joint-state feature dim
SELF_STATE_DIM = 6      # leading self-state slice
MLP1_DIMS = [64, 32]    # mlp1: Linear(13,64)+ReLU+Linear(64,32)   (no last ReLU)
LSTM_HIDDEN = 32        # LSTM hidden size
MLP_DIMS = [64, 1]      # mlp : Linear(6+32,64)+ReLU+Linear(64,1)  (no last ReLU)

BATCH = 2
SEQ = 8                 # number of humans / LSTM steps

LANE = 128
IN_PAD = 16             # input features padded 13 -> 16 (8-aligned)

# ---- compact packed-parameter slab layout (row offsets; every row is 128 lanes, f32) ----
_OFF_W1A = 0      # w1a    (13,64)  in rows 0:13 of a 16-row block
_OFF_WCOMB = 16   # W_comb (64,128) = w1b @ w_ih, i/f/o cols pre-scaled by 0.5
_OFF_WHH = 80     # w_hh   (32,128), i/f/o cols pre-scaled by 0.5
_OFF_WAS = 112    # wA_s   (6,64)   in rows 0:6 of a 16-row block; rows 6:16 MUST stay zero
_OFF_WAH = 128    # wA_h   (32,64)
_OFF_MISC = 160   # +0 b1a, +1 b_comb(scaled), +2 bA, +3 wB row (wB[:,0] in lanes 0:64), +4 bB bcast
PARAM_ROWS = 168  # multiple of 8; 168*128*4 B ~ 84 KB total slab


def _value_net_kernel(x_ref, p_ref, out_ref, *, batch, seq, hidden):
    f32 = jnp.float32
    x = x_ref[...]                                            # (seq*batch, 16), time-major rows

    b1a = p_ref[_OFF_MISC + 0:_OFF_MISC + 1, :]
    b_comb = p_ref[_OFF_MISC + 1:_OFF_MISC + 2, :]
    bA = p_ref[_OFF_MISC + 2:_OFF_MISC + 3, :]
    wB_row = p_ref[_OFF_MISC + 3:_OFF_MISC + 4, :]
    bB_row = p_ref[_OFF_MISC + 4:_OFF_MISC + 5, :]

    # ---- mlp1 layer 1 over ALL (t, b) rows at once ----
    h1 = jnp.maximum(
        jnp.dot(x, p_ref[_OFF_W1A:_OFF_W1A + IN_PAD, :], preferred_element_type=f32) + b1a,
        0.0)                                                  # (NB, 128); cols >= 64 zero

    # ---- mlp1 layer 2 fused (offline) with the LSTM input projection + bias ----
    gates_x = (jnp.dot(h1[:, :MLP1_DIMS[0]],
                       p_ref[_OFF_WCOMB:_OFF_WCOMB + MLP1_DIMS[0], :],
                       preferred_element_type=f32)
               + b_comb)                                      # (NB, 4H=128); i/f/o lanes pre-halved

    w_hh = p_ref[_OFF_WHH:_OFF_WHH + hidden, :]               # (32, 128); i/f/o lanes pre-halved

    # ---- LSTM recurrence: only h @ w_hh + one tanh sit on the serial dependency chain ----
    h = jnp.zeros((batch, hidden), f32)
    c = jnp.zeros((batch, hidden), f32)
    for t in range(seq):                                      # small static trip count -> unrolled
        gates = gates_x[t * batch:(t + 1) * batch, :] + jnp.dot(
            h, w_hh, preferred_element_type=f32)              # (B, 128) packed [i | f | g | o]
        th = jnp.tanh(gates)                                  # single full-width EUP push per step
        sg = 0.5 * th + 0.5                                   # sigmoid of the pre-halved i/f/o lanes
        i_g = sg[:, 0 * hidden:1 * hidden]
        f_g = sg[:, 1 * hidden:2 * hidden]
        g_g = th[:, 2 * hidden:3 * hidden]                    # g lanes were NOT pre-scaled
        o_g = sg[:, 3 * hidden:4 * hidden]
        c = f_g * c + i_g * g_g
        h = o_g * jnp.tanh(c)

    # ---- joint-state MLP; concat([self_state, hn]) folded into a split matmul ----
    ss = x[0:batch, :]                                        # t=0 rows; wA_s rows 6:16 zero mask
    hid = jnp.maximum(
        jnp.dot(ss, p_ref[_OFF_WAS:_OFF_WAS + IN_PAD, :], preferred_element_type=f32)
        + jnp.dot(h, p_ref[_OFF_WAH:_OFF_WAH + hidden, :], preferred_element_type=f32)
        + bA, 0.0)                                            # (B, 128); cols >= 64 zero

    # ---- Linear(64,1) as VPU multiply + XLU lane reduction (no MXU round trip) ----
    val = jnp.sum(hid * wB_row, axis=-1, keepdims=True)       # (B, 1)
    out_ref[...] = val + bB_row                               # broadcast; every lane = value


@jax.jit
def value_network2_forward(state, param_slab):
    """state: (B, N, INPUT_DIM) f32, param_slab: (PARAM_ROWS, 128) f32 -> (B, 1) f32."""
    B, N, D = state.shape
    # time-major flatten + tiny 13->16 lane pad (fuses into this executable / upstream producer)
    x = jnp.transpose(state, (1, 0, 2)).reshape(N * B, D)
    x = jnp.pad(x, ((0, 0), (0, IN_PAD - D)))
    kernel = functools.partial(_value_net_kernel, batch=B, seq=N, hidden=LSTM_HIDDEN)

    flops = (2 * N * B * IN_PAD * MLP1_DIMS[0]
             + 2 * N * B * MLP1_DIMS[0] * 4 * LSTM_HIDDEN
             + 2 * N * B * LSTM_HIDDEN * 4 * LSTM_HIDDEN
             + 2 * B * IN_PAD * MLP_DIMS[0]
             + 2 * B * LSTM_HIDDEN * MLP_DIMS[0]
             + 2 * B * MLP_DIMS[0])
    transcendentals = N * B * (4 * LSTM_HIDDEN + LSTM_HIDDEN)
    bytes_accessed = 4 * (N * B * IN_PAD + PARAM_ROWS * LANE + B * LANE)

    out = pl.pallas_call(
        kernel,
        out_shape=jax.ShapeDtypeStruct((B, LANE), jnp.float32),
        in_specs=[pl.BlockSpec(memory_space=pltpu.VMEM),
                  pl.BlockSpec(memory_space=pltpu.VMEM)],
        out_specs=pl.BlockSpec(memory_space=pltpu.VMEM),
        cost_estimate=pl.CostEstimate(flops=flops,
                                      transcendentals=transcendentals,
                                      bytes_accessed=bytes_accessed),
    )(x, param_slab)
    return out[:, :MLP_DIMS[-1]]


def make_params(key):
    """Deterministic synthetic parameters (PyTorch-style fan-in scaling), PyTorch-transposed."""
    ks = jax.random.split(key, 16)

    def lin(k, fan_in, fan_out):
        s = 1.0 / jnp.sqrt(fan_in)
        kw, kb = jax.random.split(k)
        w = jax.random.uniform(kw, (fan_in, fan_out), jnp.float32, -s, s)
        b = jax.random.uniform(kb, (1, fan_out), jnp.float32, -s, s)
        return w, b

    w1a, b1a = lin(ks[0], INPUT_DIM, MLP1_DIMS[0])
    w1b, b1b = lin(ks[1], MLP1_DIMS[0], MLP1_DIMS[1])

    s = 1.0 / jnp.sqrt(LSTM_HIDDEN)
    w_ih = jax.random.uniform(ks[2], (MLP1_DIMS[1], 4 * LSTM_HIDDEN), jnp.float32, -s, s)
    w_hh = jax.random.uniform(ks[3], (LSTM_HIDDEN, 4 * LSTM_HIDDEN), jnp.float32, -s, s)
    b_ih = jax.random.uniform(ks[4], (1, 4 * LSTM_HIDDEN), jnp.float32, -s, s)
    b_hh = jax.random.uniform(ks[5], (1, 4 * LSTM_HIDDEN), jnp.float32, -s, s)

    joint_dim = SELF_STATE_DIM + LSTM_HIDDEN
    wA, bA = lin(ks[6], joint_dim, MLP_DIMS[0])
    wB, bB = lin(ks[7], MLP_DIMS[0], MLP_DIMS[1])

    return {
        "w1a": w1a, "b1a": b1a, "w1b": w1b, "b1b": b1b,
        "w_ih": w_ih, "w_hh": w_hh, "b_lstm": b_ih + b_hh,
        "wA_s": wA[:SELF_STATE_DIM], "wA_h": wA[SELF_STATE_DIM:], "bA": bA,
        "wB": wB, "bB": bB,
    }


def pack_params(p):
    """Pack all parameters into one compact (PARAM_ROWS, 128) f32 slab (one small VMEM DMA).

    Offline fusions baked in here:
      * W_comb = w1b @ w_ih,  b_comb = b1b @ w_ih + (b_ih + b_hh)
      * i/f/o gate columns of W_comb / b_comb / w_hh pre-scaled by 0.5 so the kernel can
        recover their sigmoids from a single tanh:  sigmoid(x) = 0.5 * (1 + tanh(x / 2)).
    """
    H = LSTM_HIDDEN
    gate_scale = jnp.concatenate(
        [jnp.full((1, 2 * H), 0.5, jnp.float32),      # i, f
         jnp.ones((1, H), jnp.float32),               # g (unscaled -> tanh used directly)
         jnp.full((1, H), 0.5, jnp.float32)], axis=1)  # o

    w_comb = (p["w1b"] @ p["w_ih"]) * gate_scale                   # (64, 128)
    b_comb = (p["b1b"] @ p["w_ih"] + p["b_lstm"]) * gate_scale     # (1, 128)
    w_hh_s = p["w_hh"] * gate_scale                                # (32, 128)

    slab = jnp.zeros((PARAM_ROWS, LANE), jnp.float32)

    def put(s, row, m):
        return s.at[row:row + m.shape[0], :m.shape[1]].set(m)

    slab = put(slab, _OFF_W1A, p["w1a"])            # rows 0:13  (13:16 stay zero)
    slab = put(slab, _OFF_WCOMB, w_comb)            # rows 16:80
    slab = put(slab, _OFF_WHH, w_hh_s)              # rows 80:112
    slab = put(slab, _OFF_WAS, p["wA_s"])           # rows 112:118 (118:128 stay zero -> masks lanes 6:16)
    slab = put(slab, _OFF_WAH, p["wA_h"])           # rows 128:160
    slab = put(slab, _OFF_MISC + 0, p["b1a"])
    slab = put(slab, _OFF_MISC + 1, b_comb)
    slab = put(slab, _OFF_MISC + 2, p["bA"])
    slab = put(slab, _OFF_MISC + 3, p["wB"].T)      # (1, 64) row; lanes 64:128 zero
    slab = put(slab, _OFF_MISC + 4, jnp.broadcast_to(p["bB"], (1, LANE)))
    return slab


def reference_forward(state, p):
    """Pure-JAX re-implementation of ValueNetwork2.forward (for validation)."""
    B, N, D = state.shape
    x = state.reshape(B * N, D)
    h1 = jnp.maximum(x @ p["w1a"] + p["b1a"], 0.0)
    emb = (h1 @ p["w1b"] + p["b1b"]).reshape(B, N, -1)
    H = LSTM_HIDDEN
    h = jnp.zeros((B, H), jnp.float32)
    c = jnp.zeros((B, H), jnp.float32)
    for t in range(N):
        gates = emb[:, t] @ p["w_ih"] + h @ p["w_hh"] + p["b_lstm"]
        i_g = jax.nn.sigmoid(gates[:, :H])
        f_g = jax.nn.sigmoid(gates[:, H:2 * H])
        g_g = jnp.tanh(gates[:, 2 * H:3 * H])
        o_g = jax.nn.sigmoid(gates[:, 3 * H:])
        c = f_g * c + i_g * g_g
        h = o_g * jnp.tanh(c)
    ss = state[:, 0, :SELF_STATE_DIM]
    hid = jnp.maximum(ss @ p["wA_s"] + h @ p["wA_h"] + p["bA"], 0.0)
    return hid @ p["wB"] + p["bB"]


if __name__ == "__main__":
    key = jax.random.PRNGKey(0)
    k_state, k_params = jax.random.split(key)
    state = jax.random.normal(k_state, (BATCH, SEQ, INPUT_DIM), jnp.float32)
    params = make_params(k_params)
    slab = pack_params(params)

    value = value_network2_forward(state, slab)
    value = jax.block_until_ready(value)

    ref = reference_forward(state, params)
    assert value.shape == (BATCH, MLP_DIMS[-1])
    # Tolerance 1e-4: the offline w1b@w_ih fusion and the tanh-based sigmoid are exact in
    # real arithmetic but shift f32 rounding slightly (flagged as benign in the review).
    assert jnp.allclose(value, ref, atol=1e-4, rtol=1e-4), (value, ref)

    print("KERNEL_OK")
</pallas_src>

<mosaic_0001>
module attributes {stable_mosaic.version = 11 : i64} {
  func.func @_value_net_kernel(%arg0: memref<16x16xf32, #tpu.memory_space<vmem>>, %arg1: memref<168x128xf32, #tpu.memory_space<vmem>>, %arg2: memref<2x128xf32, #tpu.memory_space<vmem>>) attributes {dimension_semantics = [], scalar_prefetch = 0 : i64, scratch_operands = 0 : i64, tpu.core_type = #tpu.core_type<tc>} {
    %c0 = arith.constant 0 : index
    %c0_0 = arith.constant 0 : index
    %0 = vector.load %arg0[%c0, %c0_0] : memref<16x16xf32, #tpu.memory_space<vmem>>, vector<16x16xf32>
    %c160 = arith.constant 160 : index
    %c0_1 = arith.constant 0 : index
    %1 = vector.load %arg1[%c160, %c0_1] : memref<168x128xf32, #tpu.memory_space<vmem>>, vector<1x128xf32>
    %c161 = arith.constant 161 : index
    %c0_2 = arith.constant 0 : index
    %2 = vector.load %arg1[%c161, %c0_2] : memref<168x128xf32, #tpu.memory_space<vmem>>, vector<1x128xf32>
    %c162 = arith.constant 162 : index
    %c0_3 = arith.constant 0 : index
    %3 = vector.load %arg1[%c162, %c0_3] : memref<168x128xf32, #tpu.memory_space<vmem>>, vector<1x128xf32>
    %c163 = arith.constant 163 : index
    %c0_4 = arith.constant 0 : index
    %4 = vector.load %arg1[%c163, %c0_4] : memref<168x128xf32, #tpu.memory_space<vmem>>, vector<1x128xf32>
    %c164 = arith.constant 164 : index
    %c0_5 = arith.constant 0 : index
    %5 = vector.load %arg1[%c164, %c0_5] : memref<168x128xf32, #tpu.memory_space<vmem>>, vector<1x128xf32>
    %c0_6 = arith.constant 0 : index
    %c0_7 = arith.constant 0 : index
    %6 = vector.load %arg1[%c0_6, %c0_7] : memref<168x128xf32, #tpu.memory_space<vmem>>, vector<16x128xf32>
    %cst = arith.constant dense<0.000000e+00> : vector<16x128xf32>
    %7 = tpu.matmul %0, %6, %cst {dimension_numbers = #tpu.dot_dimension_numbers<[1], [0], [0], [1], [0, 0, 1, 1], [], []>} : vector<16x16xf32>, vector<16x128xf32>, vector<16x128xf32> -> vector<16x128xf32>
    %8 = vector.broadcast %1 : vector<1x128xf32> to vector<16x128xf32>
    %9 = arith.addf %7, %8 : vector<16x128xf32>
    %cst_8 = arith.constant 0.000000e+00 : f32
    %10 = vector.broadcast %cst_8 : f32 to vector<16x128xf32>
    %11 = arith.maximumf %9, %10 : vector<16x128xf32>
    %12 = vector.extract_strided_slice %11 {offsets = [0, 0], sizes = [16, 64], strides = [1, 1]} : vector<16x128xf32> to vector<16x64xf32>
    %c16 = arith.constant 16 : index
    %c0_9 = arith.constant 0 : index
    %13 = vector.load %arg1[%c16, %c0_9] : memref<168x128xf32, #tpu.memory_space<vmem>>, vector<64x128xf32>
    %cst_10 = arith.constant dense<0.000000e+00> : vector<16x128xf32>
    %14 = tpu.matmul %12, %13, %cst_10 {dimension_numbers = #tpu.dot_dimension_numbers<[1], [0], [0], [1], [0, 0, 1, 1], [], []>} : vector<16x64xf32>, vector<64x128xf32>, vector<16x128xf32> -> vector<16x128xf32>
    %15 = vector.broadcast %2 : vector<1x128xf32> to vector<16x128xf32>
    %16 = arith.addf %14, %15 : vector<16x128xf32>
    %c80 = arith.constant 80 : index
    %c0_11 = arith.constant 0 : index
    %17 = vector.load %arg1[%c80, %c0_11] : memref<168x128xf32, #tpu.memory_space<vmem>>, vector<32x128xf32>
    %cst_12 = arith.constant 0.000000e+00 : f32
    %18 = vector.broadcast %cst_12 : f32 to vector<2x32xf32>
    %cst_13 = arith.constant 0.000000e+00 : f32
    %19 = vector.broadcast %cst_13 : f32 to vector<2x32xf32>
    %20 = vector.extract_strided_slice %16 {offsets = [0, 0], sizes = [2, 128], strides = [1, 1]} : vector<16x128xf32> to vector<2x128xf32>
    %cst_14 = arith.constant dense<0.000000e+00> : vector<2x128xf32>
    %21 = tpu.matmul %18, %17, %cst_14 {dimension_numbers = #tpu.dot_dimension_numbers<[1], [0], [0], [1], [0, 0, 1, 1], [], []>} : vector<2x32xf32>, vector<32x128xf32>, vector<2x128xf32> -> vector<2x128xf32>
    %22 = arith.addf %20, %21 : vector<2x128xf32>
    %23 = math.tanh %22 : vector<2x128xf32>
    %cst_15 = arith.constant 5.000000e-01 : f32
    %24 = vector.broadcast %cst_15 : f32 to vector<2x128xf32>
    %25 = arith.mulf %24, %23 : vector<2x128xf32>
    %cst_16 = arith.constant 5.000000e-01 : f32
    %26 = vector.broadcast %cst_16 : f32 to vector<2x128xf32>
    %27 = arith.addf %25, %26 : vector<2x128xf32>
    %28 = vector.extract_strided_slice %27 {offsets = [0, 0], sizes = [2, 32], strides = [1, 1]} : vector<2x128xf32> to vector<2x32xf32>
    %29 = vector.extract_strided_slice %27 {offsets = [0, 32], sizes = [2, 32], strides = [1, 1]} : vector<2x128xf32> to vector<2x32xf32>
    %30 = vector.extract_strided_slice %23 {offsets = [0, 64], sizes = [2, 32], strides = [1, 1]} : vector<2x128xf32> to vector<2x32xf32>
    %31 = vector.extract_strided_slice %27 {offsets = [0, 96], sizes = [2, 32], strides = [1, 1]} : vector<2x128xf32> to vector<2x32xf32>
    %32 = arith.mulf %29, %19 : vector<2x32xf32>
    %33 = arith.mulf %28, %30 : vector<2x32xf32>
    %34 = arith.addf %32, %33 : vector<2x32xf32>
    %35 = math.tanh %34 : vector<2x32xf32>
    %36 = arith.mulf %31, %35 : vector<2x32xf32>
    %37 = vector.extract_strided_slice %16 {offsets = [2, 0], sizes = [2, 128], strides = [1, 1]} : vector<16x128xf32> to vector<2x128xf32>
    %cst_17 = arith.constant dense<0.000000e+00> : vector<2x128xf32>
    %38 = tpu.matmul %36, %17, %cst_17 {dimension_numbers = #tpu.dot_dimension_numbers<[1], [0], [0], [1], [0, 0, 1, 1], [], []>} : vector<2x32xf32>, vector<32x128xf32>, vector<2x128xf32> -> vector<2x128xf32>
    %39 = arith.addf %37, %38 : vector<2x128xf32>
    %40 = math.tanh %39 : vector<2x128xf32>
    %cst_18 = arith.constant 5.000000e-01 : f32
    %41 = vector.broadcast %cst_18 : f32 to vector<2x128xf32>
    %42 = arith.mulf %41, %40 : vector<2x128xf32>
    %cst_19 = arith.constant 5.000000e-01 : f32
    %43 = vector.broadcast %cst_19 : f32 to vector<2x128xf32>
    %44 = arith.addf %42, %43 : vector<2x128xf32>
    %45 = vector.extract_strided_slice %44 {offsets = [0, 0], sizes = [2, 32], strides = [1, 1]} : vector<2x128xf32> to vector<2x32xf32>
    %46 = vector.extract_strided_slice %44 {offsets = [0, 32], sizes = [2, 32], strides = [1, 1]} : vector<2x128xf32> to vector<2x32xf32>
    %47 = vector.extract_strided_slice %40 {offsets = [0, 64], sizes = [2, 32], strides = [1, 1]} : vector<2x128xf32> to vector<2x32xf32>
    %48 = vector.extract_strided_slice %44 {offsets = [0, 96], sizes = [2, 32], strides = [1, 1]} : vector<2x128xf32> to vector<2x32xf32>
    %49 = arith.mulf %46, %34 : vector<2x32xf32>
    %50 = arith.mulf %45, %47 : vector<2x32xf32>
    %51 = arith.addf %49, %50 : vector<2x32xf32>
    %52 = math.tanh %51 : vector<2x32xf32>
    %53 = arith.mulf %48, %52 : vector<2x32xf32>
    %54 = vector.extract_strided_slice %16 {offsets = [4, 0], sizes = [2, 128], strides = [1, 1]} : vector<16x128xf32> to vector<2x128xf32>
    %cst_20 = arith.constant dense<0.000000e+00> : vector<2x128xf32>
    %55 = tpu.matmul %53, %17, %cst_20 {dimension_numbers = #tpu.dot_dimension_numbers<[1], [0], [0], [1], [0, 0, 1, 1], [], []>} : vector<2x32xf32>, vector<32x128xf32>, vector<2x128xf32> -> vector<2x128xf32>
    %56 = arith.addf %54, %55 : vector<2x128xf32>
    %57 = math.tanh %56 : vector<2x128xf32>
    %cst_21 = arith.constant 5.000000e-01 : f32
    %58 = vector.broadcast %cst_21 : f32 to vector<2x128xf32>
    %59 = arith.mulf %58, %57 : vector<2x128xf32>
    %cst_22 = arith.constant 5.000000e-01 : f32
    %60 = vector.broadcast %cst_22 : f32 to vector<2x128xf32>
    %61 = arith.addf %59, %60 : vector<2x128xf32>
    %62 = vector.extract_strided_slice %61 {offsets = [0, 0], sizes = [2, 32], strides = [1, 1]} : vector<2x128xf32> to vector<2x32xf32>
    %63 = vector.extract_strided_slice %61 {offsets = [0, 32], sizes = [2, 32], strides = [1, 1]} : vector<2x128xf32> to vector<2x32xf32>
    %64 = vector.extract_strided_slice %57 {offsets = [0, 64], sizes = [2, 32], strides = [1, 1]} : vector<2x128xf32> to vector<2x32xf32>
    %65 = vector.extract_strided_slice %61 {offsets = [0, 96], sizes = [2, 32], strides = [1, 1]} : vector<2x128xf32> to vector<2x32xf32>
    %66 = arith.mulf %63, %51 : vector<2x32xf32>
    %67 = arith.mulf %62, %64 : vector<2x32xf32>
    %68 = arith.addf %66, %67 : vector<2x32xf32>
    %69 = math.tanh %68 : vector<2x32xf32>
    %70 = arith.mulf %65, %69 : vector<2x32xf32>
    %71 = vector.extract_strided_slice %16 {offsets = [6, 0], sizes = [2, 128], strides = [1, 1]} : vector<16x128xf32> to vector<2x128xf32>
    %cst_23 = arith.constant dense<0.000000e+00> : vector<2x128xf32>
    %72 = tpu.matmul %70, %17, %cst_23 {dimension_numbers = #tpu.dot_dimension_numbers<[1], [0], [0], [1], [0, 0, 1, 1], [], []>} : vector<2x32xf32>, vector<32x128xf32>, vector<2x128xf32> -> vector<2x128xf32>
    %73 = arith.addf %71, %72 : vector<2x128xf32>
    %74 = math.tanh %73 : vector<2x128xf32>
    %cst_24 = arith.constant 5.000000e-01 : f32
    %75 = vector.broadcast %cst_24 : f32 to vector<2x128xf32>
    %76 = arith.mulf %75, %74 : vector<2x128xf32>
    %cst_25 = arith.constant 5.000000e-01 : f32
    %77 = vector.broadcast %cst_25 : f32 to vector<2x128xf32>
    %78 = arith.addf %76, %77 : vector<2x128xf32>
    %79 = vector.extract_strided_slice %78 {offsets = [0, 0], sizes = [2, 32], strides = [1, 1]} : vector<2x128xf32> to vector<2x32xf32>
    %80 = vector.extract_strided_slice %78 {offsets = [0, 32], sizes = [2, 32], strides = [1, 1]} : vector<2x128xf32> to vector<2x32xf32>
    %81 = vector.extract_strided_slice %74 {offsets = [0, 64], sizes = [2, 32], strides = [1, 1]} : vector<2x128xf32> to vector<2x32xf32>
    %82 = vector.extract_strided_slice %78 {offsets = [0, 96], sizes = [2, 32], strides = [1, 1]} : vector<2x128xf32> to vector<2x32xf32>
    %83 = arith.mulf %80, %68 : vector<2x32xf32>
    %84 = arith.mulf %79, %81 : vector<2x32xf32>
    %85 = arith.addf %83, %84 : vector<2x32xf32>
    %86 = math.tanh %85 : vector<2x32xf32>
    %87 = arith.mulf %82, %86 : vector<2x32xf32>
    %88 = vector.extract_strided_slice %16 {offsets = [8, 0], sizes = [2, 128], strides = [1, 1]} : vector<16x128xf32> to vector<2x128xf32>
    %cst_26 = arith.constant dense<0.000000e+00> : vector<2x128xf32>
    %89 = tpu.matmul %87, %17, %cst_26 {dimension_numbers = #tpu.dot_dimension_numbers<[1], [0], [0], [1], [0, 0, 1, 1], [], []>} : vector<2x32xf32>, vector<32x128xf32>, vector<2x128xf32> -> vector<2x128xf32>
    %90 = arith.addf %88, %89 : vector<2x128xf32>
    %91 = math.tanh %90 : vector<2x128xf32>
    %cst_27 = arith.constant 5.000000e-01 : f32
    %92 = vector.broadcast %cst_27 : f32 to vector<2x128xf32>
    %93 = arith.mulf %92, %91 : vector<2x128xf32>
    %cst_28 = arith.constant 5.000000e-01 : f32
    %94 = vector.broadcast %cst_28 : f32 to vector<2x128xf32>
    %95 = arith.addf %93, %94 : vector<2x128xf32>
    %96 = vector.extract_strided_slice %95 {offsets = [0, 0], sizes = [2, 32], strides = [1, 1]} : vector<2x128xf32> to vector<2x32xf32>
    %97 = vector.extract_strided_slice %95 {offsets = [0, 32], sizes = [2, 32], strides = [1, 1]} : vector<2x128xf32> to vector<2x32xf32>
    %98 = vector.extract_strided_slice %91 {offsets = [0, 64], sizes = [2, 32], strides = [1, 1]} : vector<2x128xf32> to vector<2x32xf32>
    %99 = vector.extract_strided_slice %95 {offsets = [0, 96], sizes = [2, 32], strides = [1, 1]} : vector<2x128xf32> to vector<2x32xf32>
    %100 = arith.mulf %97, %85 : vector<2x32xf32>
    %101 = arith.mulf %96, %98 : vector<2x32xf32>
    %102 = arith.addf %100, %101 : vector<2x32xf32>
    %103 = math.tanh %102 : vector<2x32xf32>
    %104 = arith.mulf %99, %103 : vector<2x32xf32>
    %105 = vector.extract_strided_slice %16 {offsets = [10, 0], sizes = [2, 128], strides = [1, 1]} : vector<16x128xf32> to vector<2x128xf32>
    %cst_29 = arith.constant dense<0.000000e+00> : vector<2x128xf32>
    %106 = tpu.matmul %104, %17, %cst_29 {dimension_numbers = #tpu.dot_dimension_numbers<[1], [0], [0], [1], [0, 0, 1, 1], [], []>} : vector<2x32xf32>, vector<32x128xf32>, vector<2x128xf32> -> vector<2x128xf32>
    %107 = arith.addf %105, %106 : vector<2x128xf32>
    %108 = math.tanh %107 : vector<2x128xf32>
    %cst_30 = arith.constant 5.000000e-01 : f32
    %109 = vector.broadcast %cst_30 : f32 to vector<2x128xf32>
    %110 = arith.mulf %109, %108 : vector<2x128xf32>
    %cst_31 = arith.constant 5.000000e-01 : f32
    %111 = vector.broadcast %cst_31 : f32 to vector<2x128xf32>
    %112 = arith.addf %110, %111 : vector<2x128xf32>
    %113 = vector.extract_strided_slice %112 {offsets = [0, 0], sizes = [2, 32], strides = [1, 1]} : vector<2x128xf32> to vector<2x32xf32>
    %114 = vector.extract_strided_slice %112 {offsets = [0, 32], sizes = [2, 32], strides = [1, 1]} : vector<2x128xf32> to vector<2x32xf32>
    %115 = vector.extract_strided_slice %108 {offsets = [0, 64], sizes = [2, 32], strides = [1, 1]} : vector<2x128xf32> to vector<2x32xf32>
    %116 = vector.extract_strided_slice %112 {offsets = [0, 96], sizes = [2, 32], strides = [1, 1]} : vector<2x128xf32> to vector<2x32xf32>
    %117 = arith.mulf %114, %102 : vector<2x32xf32>
    %118 = arith.mulf %113, %115 : vector<2x32xf32>
    %119 = arith.addf %117, %118 : vector<2x32xf32>
    %120 = math.tanh %119 : vector<2x32xf32>
    %121 = arith.mulf %116, %120 : vector<2x32xf32>
    %122 = vector.extract_strided_slice %16 {offsets = [12, 0], sizes = [2, 128], strides = [1, 1]} : vector<16x128xf32> to vector<2x128xf32>
    %cst_32 = arith.constant dense<0.000000e+00> : vector<2x128xf32>
    %123 = tpu.matmul %121, %17, %cst_32 {dimension_numbers = #tpu.dot_dimension_numbers<[1], [0], [0], [1], [0, 0, 1, 1], [], []>} : vector<2x32xf32>, vector<32x128xf32>, vector<2x128xf32> -> vector<2x128xf32>
    %124 = arith.addf %122, %123 : vector<2x128xf32>
    %125 = math.tanh %124 : vector<2x128xf32>
    %cst_33 = arith.constant 5.000000e-01 : f32
    %126 = vector.broadcast %cst_33 : f32 to vector<2x128xf32>
    %127 = arith.mulf %126, %125 : vector<2x128xf32>
    %cst_34 = arith.constant 5.000000e-01 : f32
    %128 = vector.broadcast %cst_34 : f32 to vector<2x128xf32>
    %129 = arith.addf %127, %128 : vector<2x128xf32>
    %130 = vector.extract_strided_slice %129 {offsets = [0, 0], sizes = [2, 32], strides = [1, 1]} : vector<2x128xf32> to vector<2x32xf32>
    %131 = vector.extract_strided_slice %129 {offsets = [0, 32], sizes = [2, 32], strides = [1, 1]} : vector<2x128xf32> to vector<2x32xf32>
    %132 = vector.extract_strided_slice %125 {offsets = [0, 64], sizes = [2, 32], strides = [1, 1]} : vector<2x128xf32> to vector<2x32xf32>
    %133 = vector.extract_strided_slice %129 {offsets = [0, 96], sizes = [2, 32], strides = [1, 1]} : vector<2x128xf32> to vector<2x32xf32>
    %134 = arith.mulf %131, %119 : vector<2x32xf32>
    %135 = arith.mulf %130, %132 : vector<2x32xf32>
    %136 = arith.addf %134, %135 : vector<2x32xf32>
    %137 = math.tanh %136 : vector<2x32xf32>
    %138 = arith.mulf %133, %137 : vector<2x32xf32>
    %139 = vector.extract_strided_slice %16 {offsets = [14, 0], sizes = [2, 128], strides = [1, 1]} : vector<16x128xf32> to vector<2x128xf32>
    %cst_35 = arith.constant dense<0.000000e+00> : vector<2x128xf32>
    %140 = tpu.matmul %138, %17, %cst_35 {dimension_numbers = #tpu.dot_dimension_numbers<[1], [0], [0], [1], [0, 0, 1, 1], [], []>} : vector<2x32xf32>, vector<32x128xf32>, vector<2x128xf32> -> vector<2x128xf32>
    %141 = arith.addf %139, %140 : vector<2x128xf32>
    %142 = math.tanh %141 : vector<2x128xf32>
    %cst_36 = arith.constant 5.000000e-01 : f32
    %143 = vector.broadcast %cst_36 : f32 to vector<2x128xf32>
    %144 = arith.mulf %143, %142 : vector<2x128xf32>
    %cst_37 = arith.constant 5.000000e-01 : f32
    %145 = vector.broadcast %cst_37 : f32 to vector<2x128xf32>
    %146 = arith.addf %144, %145 : vector<2x128xf32>
    %147 = vector.extract_strided_slice %146 {offsets = [0, 0], sizes = [2, 32], strides = [1, 1]} : vector<2x128xf32> to vector<2x32xf32>
    %148 = vector.extract_strided_slice %146 {offsets = [0, 32], sizes = [2, 32], strides = [1, 1]} : vector<2x128xf32> to vector<2x32xf32>
    %149 = vector.extract_strided_slice %142 {offsets = [0, 64], sizes = [2, 32], strides = [1, 1]} : vector<2x128xf32> to vector<2x32xf32>
    %150 = vector.extract_strided_slice %146 {offsets = [0, 96], sizes = [2, 32], strides = [1, 1]} : vector<2x128xf32> to vector<2x32xf32>
    %151 = arith.mulf %148, %136 : vector<2x32xf32>
    %152 = arith.mulf %147, %149 : vector<2x32xf32>
    %153 = arith.addf %151, %152 : vector<2x32xf32>
    %154 = math.tanh %153 : vector<2x32xf32>
    %155 = arith.mulf %150, %154 : vector<2x32xf32>
    %156 = vector.extract_strided_slice %0 {offsets = [0, 0], sizes = [2, 16], strides = [1, 1]} : vector<16x16xf32> to vector<2x16xf32>
    %c112 = arith.constant 112 : index
    %c0_38 = arith.constant 0 : index
    %157 = vector.load %arg1[%c112, %c0_38] : memref<168x128xf32, #tpu.memory_space<vmem>>, vector<16x128xf32>
    %cst_39 = arith.constant dense<0.000000e+00> : vector<2x128xf32>
    %158 = tpu.matmul %156, %157, %cst_39 {dimension_numbers = #tpu.dot_dimension_numbers<[1], [0], [0], [1], [0, 0, 1, 1], [], []>} : vector<2x16xf32>, vector<16x128xf32>, vector<2x128xf32> -> vector<2x128xf32>
    %c128 = arith.constant 128 : index
    %c0_40 = arith.constant 0 : index
    %159 = vector.load %arg1[%c128, %c0_40] : memref<168x128xf32, #tpu.memory_space<vmem>>, vector<32x128xf32>
    %cst_41 = arith.constant dense<0.000000e+00> : vector<2x128xf32>
    %160 = tpu.matmul %155, %159, %cst_41 {dimension_numbers = #tpu.dot_dimension_numbers<[1], [0], [0], [1], [0, 0, 1, 1], [], []>} : vector<2x32xf32>, vector<32x128xf32>, vector<2x128xf32> -> vector<2x128xf32>
    %161 = arith.addf %158, %160 : vector<2x128xf32>
    %162 = vector.broadcast %3 : vector<1x128xf32> to vector<2x128xf32>
    %163 = arith.addf %161, %162 : vector<2x128xf32>
    %cst_42 = arith.constant 0.000000e+00 : f32
    %164 = vector.broadcast %cst_42 : f32 to vector<2x128xf32>
    %165 = arith.maximumf %163, %164 : vector<2x128xf32>
    %166 = vector.broadcast %4 : vector<1x128xf32> to vector<2x128xf32>
    %167 = arith.mulf %165, %166 : vector<2x128xf32>
    %cst_43 = arith.constant dense<0.000000e+00> : vector<2xf32>
    %168 = vector.multi_reduction <add>, %167, %cst_43 [1] : vector<2x128xf32> to vector<2xf32>
    %169 = vector.shape_cast %168 : vector<2xf32> to vector<2x1xf32>
    %170 = vector.broadcast %169 : vector<2x1xf32> to vector<2x128xf32>
    %171 = vector.broadcast %5 : vector<1x128xf32> to vector<2x128xf32>
    %172 = arith.addf %170, %171 : vector<2x128xf32>
    %c0_44 = arith.constant 0 : index
    %c0_45 = arith.constant 0 : index
    %173 = vector.load %arg2[%c0_44, %c0_45] : memref<2x128xf32, #tpu.memory_space<vmem>>, vector<2x128xf32>
    tpu.vector_store %arg2[%c0_44, %c0_45], %172 {strides = array<i32>} : memref<2x128xf32, #tpu.memory_space<vmem>>, vector<2x128xf32>,
    return
  }
}

</mosaic_0001>

<llo_original>
// kernel: value_network2_forward.1
$region0: #{value_network2_forward.1}
  #allocation0 [shape = 'u32[]', space=smem, size = 0x4, offset = 0x4, fixed_abs, tag = 'smem constant byte address 0x4 - core index']
  #allocation1 [shape = 'u32[144,128]{1,0:T(1,128)}', space=vmem, size = 0x12000, scoped, tag = 'internal scratch']
  %s0 = inlined_call_operand.vmem [shape: f32[16,16], index: 0, kind: input, shape index: {}]
  %s1 = inlined_call_operand.hbm [shape: f32[168,128], index: 1, kind: input, shape index: {}]
  %s2 = inlined_call_operand.vmem [shape: f32[2,128], index: 2, kind: output, shape index: {}]
  %s3 = sld [smem:[#allocation0]]
  $region22: #{value_network2_forward.1} parent=0
    _
  %s5 = ssub.s32 1, %s3
  %s6 = scalar_select 0, %s5, %s3
  $region1: #{value_network2_forward.1} parent=0
    #allocation2 [shape = 'u8[86016]{0}', space=vmem, size = 0x15000, scoped, tag = 'input window, operand 1, single buffered']
    #allocation3 [shape = 's32[1]{0}', space=sflag, size = 0x4, scoped, tag = 'scoped memory for value_network2_forward.1']
    %7 = vsyncpa [#allocation3], 0
    // Predicated region
    $region2: #{value_network2_forward.1} parent=1 // pred_check
      _
    $region3: #{value_network2_forward.1} parent=1 // pred_check_branch
      %9 = sbr.rel (0) target = $region5
    $region4: #{value_network2_forward.1} parent=1 // pred_region
      _
    $region5: #{value_network2_forward.1} parent=1 // pred_fallthru
      _
    // Predicated region
    $region6: #{value_network2_forward.1} parent=1 // pred_check
      _
    $region7: #{value_network2_forward.1} parent=1 // pred_check_branch
      %11 = sbr.rel (0) target = $region9
    $region8: #{value_network2_forward.1} parent=1 // pred_region
      %s13 = ssub.s32 2688, 2688
      %14 = vsyncadd [#allocation3], %s13
      %s15 = sshll.u32 [#allocation2], 4
      %s16 = int_to_ptr.vmem [resolvable:$true] %s15
      %21 = dma.hbm_to_vmem [thread:$0]  %s1, 2688, %s16, [#allocation3], 128, 128, 8
    $region9: #{value_network2_forward.1} parent=1 // pred_fallthru
      _
    // Predicated region
    $region10: #{value_network2_forward.1} parent=1 // pred_check
      _
    $region11: #{value_network2_forward.1} parent=1 // pred_check_branch
      %23 = sbr.rel (0) target = $region13
    $region12: #{value_network2_forward.1} parent=1 // pred_region
      %24 = dma.done [#allocation3], 2688
    $region13: #{value_network2_forward.1} parent=1 // pred_fallthru
      _
    %v25 = vld [vmem:[%s0] sm:$0xff]
    %v26 = vld [vmem:[%s0 + $0x8] sm:$0xff]
    %v27 = vld [vmem:[#allocation2 + $0xa0] sm:$0x1]
    %v28 = vld [vmem:[#allocation2 + $0xa1] sm:$0x1]
    %v29 = vld [vmem:[#allocation2 + $0xa2] sm:$0x1]
    %v30 = vld [vmem:[#allocation2 + $0xa3] sm:$0x1]
    %v31 = vld [vmem:[#allocation2 + $0xa4] sm:$0x1]
    %v32 = vld [vmem:[#allocation2] sm:$0xff]
    %v33 = vld [vmem:[#allocation2 + $0x8] sm:$0xff]
    %v34 = vlaneseq
    %v35 = vshrl.u32 %v34, 7
    %v36 = vsub.s32 0, %v35
    %v37 = vrot.slane %v27, %v36
    %vm38 = vcmask 130048
    %v40 = vsel %vm38, %v25, 0
    %v43 = vsel %vm38, %v26, 0
    %45 = vmatprep.subr.mxu0 0.0
    %46 = vmatpush1.msra.mxu0 %v32
    %47 = vmatprep.subr.mxu0 0.0
    %48 = vmatpush1.msra.mxu0 %v33
    %49 = vmatprep.subr.mxu0 0.0
    %50 = vmatpush1.msra.mxu0 0.0
    %51 = vmatprep.subr.mxu0 0.0
    %52 = vmatpush1.msra.mxu0 0.0
    %53 = vmatprep.subr.mxu0 0.0
    %54 = vmatpush1.msra.mxu0 0.0
    %55 = vmatprep.subr.mxu0 0.0
    %56 = vmatpush1.msra.mxu0 0.0
    %57 = vmatprep.subr.mxu0 0.0
    %58 = vmatpush1.msra.mxu0 0.0
    %59 = vmatprep.subr.mxu0 0.0
    %60 = vmatpush1.msra.mxu0 0.0
    %61 = vmatprep.subr.mxu0 0.0
    %62 = vmatpush1.msra.mxu0 0.0
    %63 = vmatprep.subr.mxu0 0.0
    %64 = vmatpush1.msra.mxu0 0.0
    %65 = vmatprep.subr.mxu0 0.0
    %66 = vmatpush1.msra.mxu0 0.0
    %67 = vmatprep.subr.mxu0 0.0
    %68 = vmatpush1.msra.mxu0 0.0
    %69 = vmatprep.subr.mxu0 0.0
    %70 = vmatpush1.msra.mxu0 0.0
    %71 = vmatprep.subr.mxu0 0.0
    %72 = vmatpush1.msra.mxu0 0.0
    %73 = vmatprep.subr.mxu0 0.0
    %74 = vmatpush1.msra.mxu0 0.0
    %75 = vmatprep.subr.mxu0 0.0
    %76 = vmatpush1.msra.mxu0 0.0
    %77 = vmatprep.subr.mxu0 0.0
    %78 = vmatpush1.msra.mxu0 0.0
    %79 = vmatprep.subr.mxu0 0.0
    %80 = vmatpush1.msra.mxu0 0.0
    %81 = vmatprep.subr.mxu0 0.0
    %82 = vmatpush1.msra.mxu0 0.0
    %83 = vmatprep.subr.mxu0 0.0
    %84 = vmatpush1.msra.mxu0 0.0
    %85 = vmatprep.subr.mxu0 0.0
    %86 = vmatpush1.msra.mxu0 0.0
    %87 = vmatprep.subr.mxu0 0.0
    %88 = vmatpush1.msra.mxu0 0.0
    %89 = vmatprep.subr.mxu0 0.0
    %90 = vmatpush1.msra.mxu0 0.0
    %91 = vmatprep.subr.mxu0 0.0
    %92 = vmatpush1.msra.mxu0 0.0
    %93 = vmatprep.subr.mxu0 0.0
    %94 = vmatpush1.msra.mxu0 0.0
    %95 = vmatprep.subr.mxu0 0.0
    %96 = vmatpush1.msra.mxu0 0.0
    %97 = vmatprep.subr.mxu0 0.0
    %98 = vmatpush1.msra.mxu0 0.0
    %99 = vmatprep.subr.mxu0 0.0
    %100 = vmatpush1.msra.mxu0 0.0
    %101 = vmatprep.subr.mxu0 0.0
    %102 = vmatpush1.msra.mxu0 0.0
    %103 = vmatprep.subr.mxu0 0.0
    %104 = vmatpush1.msra.mxu0 0.0
    %105 = vmatprep.subr.mxu0 0.0
    %106 = vmatpush1.msra.mxu0 0.0
    %107 = vmatprep.subr.mxu0 0.0
    %108 = vmatpush1.msra.mxu0 0.0
    %109 = vmatprep.mubr.f32.mxu0 0.0
    %110 = vmatmul.mubr.f32.gmra.mrb[0].mxu0 %v40
    %v111 = vpop.f32.mrb[0].mxu0
    %v112 = vadd.f32 %v37, %v111
    %v113 = vpop.f32.mrb[0].mxu0
    %114 = vmatprep.mubr.f32.mxu0 0.0
    %115 = vmatmul.mubr.f32.gmra.mrb[0].mxu0 %v43
    %v116 = vpop.f32.mrb[0].mxu0
    %v117 = vadd.f32 %v37, %v116
    %v118 = vpop.f32.mrb[0].mxu0
    %119 = vdwg.mxu0
    %v120 = vmax.f32 %v112, 0.0
    %v121 = vmax.f32 %v117, 0.0
    %v122 = vld [vmem:[#allocation2 + $0x10] sm:$0xff]
    %v123 = vld [vmem:[#allocation2 + $0x18] sm:$0xff]
    %v124 = vld [vmem:[#allocation2 + $0x20] sm:$0xff]
    %v125 = vld [vmem:[#allocation2 + $0x28] sm:$0xff]
    %v126 = vld [vmem:[#allocation2 + $0x30] sm:$0xff]
    %v127 = vld [vmem:[#allocation2 + $0x38] sm:$0xff]
    %v128 = vld [vmem:[#allocation2 + $0x40] sm:$0xff]
    %v129 = vld [vmem:[#allocation2 + $0x48] sm:$0xff]
    %v130 = vlaneseq
    %v131 = vshrl.u32 %v130, 7
    %v132 = vsub.s32 0, %v131
    %v133 = vrot.slane %v28, %v132
    %vm134 = vcmask 523264
    %v136 = vsel %vm134, %v120, 0
    %v139 = vsel %vm134, %v121, 0
    %141 = vmatprep.subr.mxu0 0.0
    %142 = vmatpush1.msra.mxu0 %v122
    %143 = vmatprep.subr.mxu0 0.0
    %144 = vmatpush1.msra.mxu0 %v123
    %145 = vmatprep.subr.mxu0 0.0
    %146 = vmatpush1.msra.mxu0 %v124
    %147 = vmatprep.subr.mxu0 0.0
    %148 = vmatpush1.msra.mxu0 %v125
    %149 = vmatprep.subr.mxu0 0.0
    %150 = vmatpush1.msra.mxu0 %v126
    %151 = vmatprep.subr.mxu0 0.0
    %152 = vmatpush1.msra.mxu0 %v127
    %153 = vmatprep.subr.mxu0 0.0
    %154 = vmatpush1.msra.mxu0 %v128
    %155 = vmatprep.subr.mxu0 0.0
    %156 = vmatpush1.msra.mxu0 %v129
    %157 = vmatprep.subr.mxu0 0.0
    %158 = vmatpush1.msra.mxu0 0.0
    %159 = vmatprep.subr.mxu0 0.0
    %160 = vmatpush1.msra.mxu0 0.0
    %161 = vmatprep.subr.mxu0 0.0
    %162 = vmatpush1.msra.mxu0 0.0
    %163 = vmatprep.subr.mxu0 0.0
    %164 = vmatpush1.msra.mxu0 0.0
    %165 = vmatprep.subr.mxu0 0.0
    %166 = vmatpush1.msra.mxu0 0.0
    %167 = vmatprep.subr.mxu0 0.0
    %168 = vmatpush1.msra.mxu0 0.0
    %169 = vmatprep.subr.mxu0 0.0
    %170 = vmatpush1.msra.mxu0 0.0
    %171 = vmatprep.subr.mxu0 0.0
    %172 = vmatpush1.msra.mxu0 0.0
    %173 = vmatprep.subr.mxu0 0.0
    %174 = vmatpush1.msra.mxu0 0.0
    %175 = vmatprep.subr.mxu0 0.0
    %176 = vmatpush1.msra.mxu0 0.0
    %177 = vmatprep.subr.mxu0 0.0
    %178 = vmatpush1.msra.mxu0 0.0
    %179 = vmatprep.subr.mxu0 0.0
    %180 = vmatpush1.msra.mxu0 0.0
    %181 = vmatprep.subr.mxu0 0.0
    %182 = vmatpush1.msra.mxu0 0.0
    %183 = vmatprep.subr.mxu0 0.0
    %184 = vmatpush1.msra.mxu0 0.0
    %185 = vmatprep.subr.mxu0 0.0
    %186 = vmatpush1.msra.mxu0 0.0
    %187 = vmatprep.subr.mxu0 0.0
    %188 = vmatpush1.msra.mxu0 0.0
    %189 = vmatprep.subr.mxu0 0.0
    %190 = vmatpush1.msra.mxu0 0.0
    %191 = vmatprep.subr.mxu0 0.0
    %192 = vmatpush1.msra.mxu0 0.0
    %193 = vmatprep.subr.mxu0 0.0
    %194 = vmatpush1.msra.mxu0 0.0
    %195 = vmatprep.subr.mxu0 0.0
    %196 = vmatpush1.msra.mxu0 0.0
    %197 = vmatprep.subr.mxu0 0.0
    %198 = vmatpush1.msra.mxu0 0.0
    %199 = vmatprep.subr.mxu0 0.0
    %200 = vmatpush1.msra.mxu0 0.0
    %201 = vmatprep.subr.mxu0 0.0
    %202 = vmatpush1.msra.mxu0 0.0
    %203 = vmatprep.subr.mxu0 0.0
    %204 = vmatpush1.msra.mxu0 0.0
    %205 = vmatprep.mubr.f32.mxu0 0.0
    %206 = vmatmul.mubr.f32.gmra.mrb[0].mxu0 %v136
    %v207 = vpop.f32.mrb[0].mxu0
    %v208 = vadd.f32 %v133, %v207
    %v209 = vpop.f32.mrb[0].mxu0
    %210 = vmatprep.mubr.f32.mxu0 0.0
    %211 = vmatmul.mubr.f32.gmra.mrb[0].mxu0 %v139
    %v212 = vpop.f32.mrb[0].mxu0
    %v213 = vadd.f32 %v133, %v212
    %v214 = vpop.f32.mrb[0].mxu0
    %215 = vdwg.mxu0
    %v216 = vld [vmem:[#allocation2 + $0x50] sm:$0xff]
    %v217 = vld [vmem:[#allocation2 + $0x58] sm:$0xff]
    %v218 = vld [vmem:[#allocation2 + $0x60] sm:$0xff]
    %v219 = vld [vmem:[#allocation2 + $0x68] sm:$0xff]
    %vm220 = vcmask 261120
    %v222 = vsel %vm220, 0.0, 0
    %224 = vmatprep.subr.mxu0 0.0
    %225 = vmatpush1.msra.mxu0 %v216
    %226 = vmatprep.subr.mxu0 0.0
    %227 = vmatpush1.msra.mxu0 %v217
    %228 = vmatprep.subr.mxu0 0.0
    %229 = vmatpush1.msra.mxu0 %v218
    %230 = vmatprep.subr.mxu0 0.0
    %231 = vmatpush1.msra.mxu0 %v219
    %232 = vmatprep.subr.mxu0 0.0
    %233 = vmatpush1.msra.mxu0 0.0
    %234 = vmatprep.subr.mxu0 0.0
    %235 = vmatpush1.msra.mxu0 0.0
    %236 = vmatprep.subr.mxu0 0.0
    %237 = vmatpush1.msra.mxu0 0.0
    %238 = vmatprep.subr.mxu0 0.0
    %239 = vmatpush1.msra.mxu0 0.0
    %240 = vmatprep.subr.mxu0 0.0
    %241 = vmatpush1.msra.mxu0 0.0
    %242 = vmatprep.subr.mxu0 0.0
    %243 = vmatpush1.msra.mxu0 0.0
    %244 = vmatprep.subr.mxu0 0.0
    %245 = vmatpush1.msra.mxu0 0.0
    %246 = vmatprep.subr.mxu0 0.0
    %247 = vmatpush1.msra.mxu0 0.0
    %248 = vmatprep.subr.mxu0 0.0
    %249 = vmatpush1.msra.mxu0 0.0
    %250 = vmatprep.subr.mxu0 0.0
    %251 = vmatpush1.msra.mxu0 0.0
    %252 = vmatprep.subr.mxu0 0.0
    %253 = vmatpush1.msra.mxu0 0.0
    %254 = vmatprep.subr.mxu0 0.0
    %255 = vmatpush1.msra.mxu0 0.0
    %256 = vmatprep.subr.mxu0 0.0
    %257 = vmatpush1.msra.mxu0 0.0
    %258 = vmatprep.subr.mxu0 0.0
    %259 = vmatpush1.msra.mxu0 0.0
    %260 = vmatprep.subr.mxu0 0.0
    %261 = vmatpush1.msra.mxu0 0.0
    %262 = vmatprep.subr.mxu0 0.0
    %263 = vmatpush1.msra.mxu0 0.0
    %264 = vmatprep.subr.mxu0 0.0
    %265 = vmatpush1.msra.mxu0 0.0
    %266 = vmatprep.subr.mxu0 0.0
    %267 = vmatpush1.msra.mxu0 0.0
    %268 = vmatprep.subr.mxu0 0.0
    %269 = vmatpush1.msra.mxu0 0.0
    %270 = vmatprep.subr.mxu0 0.0
    %271 = vmatpush1.msra.mxu0 0.0
    %272 = vmatprep.subr.mxu0 0.0
    %273 = vmatpush1.msra.mxu0 0.0
    %274 = vmatprep.subr.mxu0 0.0
    %275 = vmatpush1.msra.mxu0 0.0
    %276 = vmatprep.subr.mxu0 0.0
    %277 = vmatpush1.msra.mxu0 0.0
    %278 = vmatprep.subr.mxu0 0.0
    %279 = vmatpush1.msra.mxu0 0.0
    %280 = vmatprep.subr.mxu0 0.0
    %281 = vmatpush1.msra.mxu0 0.0
    %282 = vmatprep.subr.mxu0 0.0
    %283 = vmatpush1.msra.mxu0 0.0
    %284 = vmatprep.subr.mxu0 0.0
    %285 = vmatpush1.msra.mxu0 0.0
    %286 = vmatprep.subr.mxu0 0.0
    %287 = vmatpush1.msra.mxu0 0.0
    %288 = vmatprep.mubr.f32.mxu0 0.0
    %289 = vmatmul.mubr.f32.gmra.mrb[0].mxu0 %v222
    %v290 = vpop.f32.mrb[0].mxu0
    %v291 = vadd.f32 0.0, %v290
    %v292 = vpop.f32.mrb[0].mxu0
    %293 = vdwg.mxu0
    %v294 = vadd.f32 %v208, %v291
    %v295 = vtanh.pop %v294
    %v296 = vmul.f32 %v295, 0.5
    %v297 = vadd.f32 %v296, 0.5
    %v298 = vmul.f32 %v297, 0.0
    %300 = vrot.lane.b32.xlu0 %v295, 64
    %v301 = vpop.permute.xlu0 %300
    %v303 = vmul.f32 %v297, %v301
    %305 = vrot.lane.b32.xlu0 %v303, 32
    %v306 = vpop.permute.xlu0 %305
    %v308 = vadd.f32 %v298, %v306
    %v309 = vtanh.pop %v308
    %311 = vrot.lane.b32.xlu0 %v309, 64
    %v312 = vpop.permute.xlu0 %311
    %v314 = vmul.f32 %v297, %v312
    %316 = vrot.lane.b32.xlu0 %v314, 32
    %v317 = vpop.permute.xlu0 %316
    %v318 = vsel %vm220, %v317, 0
    %320 = vmatprep.subr.mxu0 0.0
    %321 = vmatpush1.msra.mxu0 %v216
    %322 = vmatprep.subr.mxu0 0.0
    %323 = vmatpush1.msra.mxu0 %v217
    %324 = vmatprep.subr.mxu0 0.0
    %325 = vmatpush1.msra.mxu0 %v218
    %326 = vmatprep.subr.mxu0 0.0
    %327 = vmatpush1.msra.mxu0 %v219
    %328 = vmatprep.subr.mxu0 0.0
    %329 = vmatpush1.msra.mxu0 0.0
    %330 = vmatprep.subr.mxu0 0.0
    %331 = vmatpush1.msra.mxu0 0.0
    %332 = vmatprep.subr.mxu0 0.0
    %333 = vmatpush1.msra.mxu0 0.0
    %334 = vmatprep.subr.mxu0 0.0
    %335 = vmatpush1.msra.mxu0 0.0
    %336 = vmatprep.subr.mxu0 0.0
    %337 = vmatpush1.msra.mxu0 0.0
    %338 = vmatprep.subr.mxu0 0.0
    %339 = vmatpush1.msra.mxu0 0.0
    %340 = vmatprep.subr.mxu0 0.0
    %341 = vmatpush1.msra.mxu0 0.0
    %342 = vmatprep.subr.mxu0 0.0
    %343 = vmatpush1.msra.mxu0 0.0
    %344 = vmatprep.subr.mxu0 0.0
    %345 = vmatpush1.msra.mxu0 0.0
    %346 = vmatprep.subr.mxu0 0.0
    %347 = vmatpush1.msra.mxu0 0.0
    %348 = vmatprep.subr.mxu0 0.0
    %349 = vmatpush1.msra.mxu0 0.0
    %350 = vmatprep.subr.mxu0 0.0
    %351 = vmatpush1.msra.mxu0 0.0
    %352 = vmatprep.subr.mxu0 0.0
    %353 = vmatpush1.msra.mxu0 0.0
    %354 = vmatprep.subr.mxu0 0.0
    %355 = vmatpush1.msra.mxu0 0.0
    %356 = vmatprep.subr.mxu0 0.0
    %357 = vmatpush1.msra.mxu0 0.0
    %358 = vmatprep.subr.mxu0 0.0
    %359 = vmatpush1.msra.mxu0 0.0
    %360 = vmatprep.subr.mxu0 0.0
    %361 = vmatpush1.msra.mxu0 0.0
    %362 = vmatprep.subr.mxu0 0.0
    %363 = vmatpush1.msra.mxu0 0.0
    %364 = vmatprep.subr.mxu0 0.0
    %365 = vmatpush1.msra.mxu0 0.0
    %366 = vmatprep.subr.mxu0 0.0
    %367 = vmatpush1.msra.mxu0 0.0
    %368 = vmatprep.subr.mxu0 0.0
    %369 = vmatpush1.msra.mxu0 0.0
    %370 = vmatprep.subr.mxu0 0.0
    %371 = vmatpush1.msra.mxu0 0.0
    %372 = vmatprep.subr.mxu0 0.0
    %373 = vmatpush1.msra.mxu0 0.0
    %374 = vmatprep.subr.mxu0 0.0
    %375 = vmatpush1.msra.mxu0 0.0
    %376 = vmatprep.subr.mxu0 0.0
    %377 = vmatpush1.msra.mxu0 0.0
    %378 = vmatprep.subr.mxu0 0.0
    %379 = vmatpush1.msra.mxu0 0.0
    %380 = vmatprep.subr.mxu0 0.0
    %381 = vmatpush1.msra.mxu0 0.0
    %382 = vmatprep.subr.mxu0 0.0
    %383 = vmatpush1.msra.mxu0 0.0
    %384 = vmatprep.mubr.f32.mxu0 0.0
    %385 = vmatmul.mubr.f32.gmra.mrb[0].mxu0 %v318
    %v386 = vpop.f32.mrb[0].mxu0
    %v387 = vadd.f32 0.0, %v386
    %v388 = vpop.f32.mrb[0].mxu0
    %389 = vdwg.mxu0
    %v391 = vrot.slane %v387, 6
    %v393 = vadd.f32 %v208, %v391
    %v394 = vtanh.pop %v393
    %v395 = vmul.f32 %v394, 0.5
    %v396 = vadd.f32 %v395, 0.5
    %v398 = vrot.slane %v308, 6
    %v400 = vmul.f32 %v396, %v398
    %402 = vrot.lane.b32.xlu0 %v394, 64
    %v403 = vpop.permute.xlu0 %402
    %v405 = vmul.f32 %v396, %v403
    %407 = vrot.lane.b32.xlu0 %v405, 32
    %v408 = vpop.permute.xlu0 %407
    %v410 = vadd.f32 %v400, %v408
    %v411 = vtanh.pop %v410
    %413 = vrot.lane.b32.xlu0 %v411, 64
    %v414 = vpop.permute.xlu0 %413
    %v416 = vmul.f32 %v396, %v414
    %v418 = vrot.slane %v416, 2
    %419 = vrot.lane.b32.xlu0 %v418, 32
    %v420 = vpop.permute.xlu0 %419
    %v421 = vsel %vm220, %v420, 0
    %423 = vmatprep.subr.mxu0 0.0
    %424 = vmatpush1.msra.mxu0 %v216
    %425 = vmatprep.subr.mxu0 0.0
    %426 = vmatpush1.msra.mxu0 %v217
    %427 = vmatprep.subr.mxu0 0.0
    %428 = vmatpush1.msra.mxu0 %v218
    %429 = vmatprep.subr.mxu0 0.0
    %430 = vmatpush1.msra.mxu0 %v219
    %431 = vmatprep.subr.mxu0 0.0
    %432 = vmatpush1.msra.mxu0 0.0
    %433 = vmatprep.subr.mxu0 0.0
    %434 = vmatpush1.msra.mxu0 0.0
    %435 = vmatprep.subr.mxu0 0.0
    %436 = vmatpush1.msra.mxu0 0.0
    %437 = vmatprep.subr.mxu0 0.0
    %438 = vmatpush1.msra.mxu0 0.0
    %439 = vmatprep.subr.mxu0 0.0
    %440 = vmatpush1.msra.mxu0 0.0
    %441 = vmatprep.subr.mxu0 0.0
    %442 = vmatpush1.msra.mxu0 0.0
    %443 = vmatprep.subr.mxu0 0.0
    %444 = vmatpush1.msra.mxu0 0.0
    %445 = vmatprep.subr.mxu0 0.0
    %446 = vmatpush1.msra.mxu0 0.0
    %447 = vmatprep.subr.mxu0 0.0
    %448 = vmatpush1.msra.mxu0 0.0
    %449 = vmatprep.subr.mxu0 0.0
    %450 = vmatpush1.msra.mxu0 0.0
    %451 = vmatprep.subr.mxu0 0.0
    %452 = vmatpush1.msra.mxu0 0.0
    %453 = vmatprep.subr.mxu0 0.0
    %454 = vmatpush1.msra.mxu0 0.0
    %455 = vmatprep.subr.mxu0 0.0
    %456 = vmatpush1.msra.mxu0 0.0
    %457 = vmatprep.subr.mxu0 0.0
    %458 = vmatpush1.msra.mxu0 0.0
    %459 = vmatprep.subr.mxu0 0.0
    %460 = vmatpush1.msra.mxu0 0.0
    %461 = vmatprep.subr.mxu0 0.0
    %462 = vmatpush1.msra.mxu0 0.0
    %463 = vmatprep.subr.mxu0 0.0
    %464 = vmatpush1.msra.mxu0 0.0
    %465 = vmatprep.subr.mxu0 0.0
    %466 = vmatpush1.msra.mxu0 0.0
    %467 = vmatprep.subr.mxu0 0.0
    %468 = vmatpush1.msra.mxu0 0.0
    %469 = vmatprep.subr.mxu0 0.0
    %470 = vmatpush1.msra.mxu0 0.0
    %471 = vmatprep.subr.mxu0 0.0
    %472 = vmatpush1.msra.mxu0 0.0
    %473 = vmatprep.subr.mxu0 0.0
    %474 = vmatpush1.msra.mxu0 0.0
    %475 = vmatprep.subr.mxu0 0.0
    %476 = vmatpush1.msra.mxu0 0.0
    %477 = vmatprep.subr.mxu0 0.0
    %478 = vmatpush1.msra.mxu0 0.0
    %479 = vmatprep.subr.mxu0 0.0
    %480 = vmatpush1.msra.mxu0 0.0
    %481 = vmatprep.subr.mxu0 0.0
    %482 = vmatpush1.msra.mxu0 0.0
    %483 = vmatprep.subr.mxu0 0.0
    %484 = vmatpush1.msra.mxu0 0.0
    %485 = vmatprep.subr.mxu0 0.0
    %486 = vmatpush1.msra.mxu0 0.0
    %487 = vmatprep.mubr.f32.mxu0 0.0
    %488 = vmatmul.mubr.f32.gmra.mrb[0].mxu0 %v421
    %v489 = vpop.f32.mrb[0].mxu0
    %v490 = vadd.f32 0.0, %v489
    %v491 = vpop.f32.mrb[0].mxu0
    %492 = vdwg.mxu0
    %v494 = vrot.slane %v490, 4
    %v496 = vadd.f32 %v208, %v494
    %v497 = vtanh.pop %v496
    %v498 = vmul.f32 %v497, 0.5
    %v499 = vadd.f32 %v498, 0.5
    %v501 = vrot.slane %v410, 6
    %v503 = vmul.f32 %v499, %v501
    %505 = vrot.lane.b32.xlu0 %v497, 64
    %v506 = vpop.permute.xlu0 %505
    %v508 = vmul.f32 %v499, %v506
    %510 = vrot.lane.b32.xlu0 %v508, 32
    %v511 = vpop.permute.xlu0 %510
    %v513 = vadd.f32 %v503, %v511
    %v514 = vtanh.pop %v513
    %516 = vrot.lane.b32.xlu0 %v514, 64
    %v517 = vpop.permute.xlu0 %516
    %v519 = vmul.f32 %v499, %v517
    %v521 = vrot.slane %v519, 4
    %522 = vrot.lane.b32.xlu0 %v521, 32
    %v523 = vpop.permute.xlu0 %522
    %v524 = vsel %vm220, %v523, 0
    %526 = vmatprep.subr.mxu0 0.0
    %527 = vmatpush1.msra.mxu0 %v216
    %528 = vmatprep.subr.mxu0 0.0
    %529 = vmatpush1.msra.mxu0 %v217
    %530 = vmatprep.subr.mxu0 0.0
    %531 = vmatpush1.msra.mxu0 %v218
    %532 = vmatprep.subr.mxu0 0.0
    %533 = vmatpush1.msra.mxu0 %v219
    %534 = vmatprep.subr.mxu0 0.0
    %535 = vmatpush1.msra.mxu0 0.0
    %536 = vmatprep.subr.mxu0 0.0
    %537 = vmatpush1.msra.mxu0 0.0
    %538 = vmatprep.subr.mxu0 0.0
    %539 = vmatpush1.msra.mxu0 0.0
    %540 = vmatprep.subr.mxu0 0.0
    %541 = vmatpush1.msra.mxu0 0.0
    %542 = vmatprep.subr.mxu0 0.0
    %543 = vmatpush1.msra.mxu0 0.0
    %544 = vmatprep.subr.mxu0 0.0
    %545 = vmatpush1.msra.mxu0 0.0
    %546 = vmatprep.subr.mxu0 0.0
    %547 = vmatpush1.msra.mxu0 0.0
    %548 = vmatprep.subr.mxu0 0.0
    %549 = vmatpush1.msra.mxu0 0.0
    %550 = vmatprep.subr.mxu0 0.0
    %551 = vmatpush1.msra.mxu0 0.0
    %552 = vmatprep.subr.mxu0 0.0
    %553 = vmatpush1.msra.mxu0 0.0
    %554 = vmatprep.subr.mxu0 0.0
    %555 = vmatpush1.msra.mxu0 0.0
    %556 = vmatprep.subr.mxu0 0.0
    %557 = vmatpush1.msra.mxu0 0.0
    %558 = vmatprep.subr.mxu0 0.0
    %559 = vmatpush1.msra.mxu0 0.0
    %560 = vmatprep.subr.mxu0 0.0
    %561 = vmatpush1.msra.mxu0 0.0
    %562 = vmatprep.subr.mxu0 0.0
    %563 = vmatpush1.msra.mxu0 0.0
    %564 = vmatprep.subr.mxu0 0.0
    %565 = vmatpush1.msra.mxu0 0.0
    %566 = vmatprep.subr.mxu0 0.0
    %567 = vmatpush1.msra.mxu0 0.0
    %568 = vmatprep.subr.mxu0 0.0
    %569 = vmatpush1.msra.mxu0 0.0
    %570 = vmatprep.subr.mxu0 0.0
    %571 = vmatpush1.msra.mxu0 0.0
    %572 = vmatprep.subr.mxu0 0.0
    %573 = vmatpush1.msra.mxu0 0.0
    %574 = vmatprep.subr.mxu0 0.0
    %575 = vmatpush1.msra.mxu0 0.0
    %576 = vmatprep.subr.mxu0 0.0
    %577 = vmatpush1.msra.mxu0 0.0
    %578 = vmatprep.subr.mxu0 0.0
    %579 = vmatpush1.msra.mxu0 0.0
    %580 = vmatprep.subr.mxu0 0.0
    %581 = vmatpush1.msra.mxu0 0.0
    %582 = vmatprep.subr.mxu0 0.0
    %583 = vmatpush1.msra.mxu0 0.0
    %584 = vmatprep.subr.mxu0 0.0
    %585 = vmatpush1.msra.mxu0 0.0
    %586 = vmatprep.subr.mxu0 0.0
    %587 = vmatpush1.msra.mxu0 0.0
    %588 = vmatprep.subr.mxu0 0.0
    %589 = vmatpush1.msra.mxu0 0.0
    %590 = vmatprep.mubr.f32.mxu0 0.0
    %591 = vmatmul.mubr.f32.gmra.mrb[0].mxu0 %v524
    %v592 = vpop.f32.mrb[0].mxu0
    %v593 = vadd.f32 0.0, %v592
    %v594 = vpop.f32.mrb[0].mxu0
    %595 = vdwg.mxu0
    %v597 = vrot.slane %v593, 2
    %v599 = vadd.f32 %v208, %v597
    %v600 = vtanh.pop %v599
    %v601 = vmul.f32 %v600, 0.5
    %v602 = vadd.f32 %v601, 0.5
    %v604 = vrot.slane %v513, 6
    %v606 = vmul.f32 %v602, %v604
    %608 = vrot.lane.b32.xlu0 %v600, 64
    %v609 = vpop.permute.xlu0 %608
    %v611 = vmul.f32 %v602, %v609
    %613 = vrot.lane.b32.xlu0 %v611, 32
    %v614 = vpop.permute.xlu0 %613
    %v616 = vadd.f32 %v606, %v614
    %v617 = vtanh.pop %v616
    %619 = vrot.lane.b32.xlu0 %v617, 64
    %v620 = vpop.permute.xlu0 %619
    %v622 = vmul.f32 %v602, %v620
    %v624 = vrot.slane %v622, 6
    %625 = vrot.lane.b32.xlu0 %v624, 32
    %v626 = vpop.permute.xlu0 %625
    %v627 = vsel %vm220, %v626, 0
    %629 = vmatprep.subr.mxu0 0.0
    %630 = vmatpush1.msra.mxu0 %v216
    %631 = vmatprep.subr.mxu0 0.0
    %632 = vmatpush1.msra.mxu0 %v217
    %633 = vmatprep.subr.mxu0 0.0
    %634 = vmatpush1.msra.mxu0 %v218
    %635 = vmatprep.subr.mxu0 0.0
    %636 = vmatpush1.msra.mxu0 %v219
    %637 = vmatprep.subr.mxu0 0.0
    %638 = vmatpush1.msra.mxu0 0.0
    %639 = vmatprep.subr.mxu0 0.0
    %640 = vmatpush1.msra.mxu0 0.0
    %641 = vmatprep.subr.mxu0 0.0
    %642 = vmatpush1.msra.mxu0 0.0
    %643 = vmatprep.subr.mxu0 0.0
    %644 = vmatpush1.msra.mxu0 0.0
    %645 = vmatprep.subr.mxu0 0.0
    %646 = vmatpush1.msra.mxu0 0.0
    %647 = vmatprep.subr.mxu0 0.0
    %648 = vmatpush1.msra.mxu0 0.0
    %649 = vmatprep.subr.mxu0 0.0
    %650 = vmatpush1.msra.mxu0 0.0
    %651 = vmatprep.subr.mxu0 0.0
    %652 = vmatpush1.msra.mxu0 0.0
    %653 = vmatprep.subr.mxu0 0.0
    %654 = vmatpush1.msra.mxu0 0.0
    %655 = vmatprep.subr.mxu0 0.0
    %656 = vmatpush1.msra.mxu0 0.0
    %657 = vmatprep.subr.mxu0 0.0
    %658 = vmatpush1.msra.mxu0 0.0
    %659 = vmatprep.subr.mxu0 0.0
    %660 = vmatpush1.msra.mxu0 0.0
    %661 = vmatprep.subr.mxu0 0.0
    %662 = vmatpush1.msra.mxu0 0.0
    %663 = vmatprep.subr.mxu0 0.0
    %664 = vmatpush1.msra.mxu0 0.0
    %665 = vmatprep.subr.mxu0 0.0
    %666 = vmatpush1.msra.mxu0 0.0
    %667 = vmatprep.subr.mxu0 0.0
    %668 = vmatpush1.msra.mxu0 0.0
    %669 = vmatprep.subr.mxu0 0.0
    %670 = vmatpush1.msra.mxu0 0.0
    %671 = vmatprep.subr.mxu0 0.0
    %672 = vmatpush1.msra.mxu0 0.0
    %673 = vmatprep.subr.mxu0 0.0
    %674 = vmatpush1.msra.mxu0 0.0
    %675 = vmatprep.subr.mxu0 0.0
    %676 = vmatpush1.msra.mxu0 0.0
    %677 = vmatprep.subr.mxu0 0.0
    %678 = vmatpush1.msra.mxu0 0.0
    %679 = vmatprep.subr.mxu0 0.0
    %680 = vmatpush1.msra.mxu0 0.0
    %681 = vmatprep.subr.mxu0 0.0
    %682 = vmatpush1.msra.mxu0 0.0
    %683 = vmatprep.subr.mxu0 0.0
    %684 = vmatpush1.msra.mxu0 0.0
    %685 = vmatprep.subr.mxu0 0.0
    %686 = vmatpush1.msra.mxu0 0.0
    %687 = vmatprep.subr.mxu0 0.0
    %688 = vmatpush1.msra.mxu0 0.0
    %689 = vmatprep.subr.mxu0 0.0
    %690 = vmatpush1.msra.mxu0 0.0
    %691 = vmatprep.subr.mxu0 0.0
    %692 = vmatpush1.msra.mxu0 0.0
    %693 = vmatprep.mubr.f32.mxu0 0.0
    %694 = vmatmul.mubr.f32.gmra.mrb[0].mxu0 %v627
    %v695 = vpop.f32.mrb[0].mxu0
    %v696 = vadd.f32 0.0, %v695
    %v697 = vpop.f32.mrb[0].mxu0
    %698 = vdwg.mxu0
    %v699 = vadd.f32 %v213, %v696
    %v700 = vtanh.pop %v699
    %v701 = vmul.f32 %v700, 0.5
    %v702 = vadd.f32 %v701, 0.5
    %v704 = vrot.slane %v616, 6
    %v706 = vmul.f32 %v702, %v704
    %708 = vrot.lane.b32.xlu0 %v700, 64
    %v709 = vpop.permute.xlu0 %708
    %v711 = vmul.f32 %v702, %v709
    %713 = vrot.lane.b32.xlu0 %v711, 32
    %v714 = vpop.permute.xlu0 %713
    %v716 = vadd.f32 %v706, %v714
    %v717 = vtanh.pop %v716
    %719 = vrot.lane.b32.xlu0 %v717, 64
    %v720 = vpop.permute.xlu0 %719
    %v722 = vmul.f32 %v702, %v720
    %724 = vrot.lane.b32.xlu0 %v722, 32
    %v725 = vpop.permute.xlu0 %724
    %v726 = vsel %vm220, %v725, 0
    %728 = vmatprep.subr.mxu0 0.0
    %729 = vmatpush1.msra.mxu0 %v216
    %730 = vmatprep.subr.mxu0 0.0
    %731 = vmatpush1.msra.mxu0 %v217
    %732 = vmatprep.subr.mxu0 0.0
    %733 = vmatpush1.msra.mxu0 %v218
    %734 = vmatprep.subr.mxu0 0.0
    %735 = vmatpush1.msra.mxu0 %v219
    %736 = vmatprep.subr.mxu0 0.0
    %737 = vmatpush1.msra.mxu0 0.0
    %738 = vmatprep.subr.mxu0 0.0
    %739 = vmatpush1.msra.mxu0 0.0
    %740 = vmatprep.subr.mxu0 0.0
    %741 = vmatpush1.msra.mxu0 0.0
    %742 = vmatprep.subr.mxu0 0.0
    %743 = vmatpush1.msra.mxu0 0.0
    %744 = vmatprep.subr.mxu0 0.0
    %745 = vmatpush1.msra.mxu0 0.0
    %746 = vmatprep.subr.mxu0 0.0
    %747 = vmatpush1.msra.mxu0 0.0
    %748 = vmatprep.subr.mxu0 0.0
    %749 = vmatpush1.msra.mxu0 0.0
    %750 = vmatprep.subr.mxu0 0.0
    %751 = vmatpush1.msra.mxu0 0.0
    %752 = vmatprep.subr.mxu0 0.0
    %753 = vmatpush1.msra.mxu0 0.0
    %754 = vmatprep.subr.mxu0 0.0
    %755 = vmatpush1.msra.mxu0 0.0
    %756 = vmatprep.subr.mxu0 0.0
    %757 = vmatpush1.msra.mxu0 0.0
    %758 = vmatprep.subr.mxu0 0.0
    %759 = vmatpush1.msra.mxu0 0.0
    %760 = vmatprep.subr.mxu0 0.0
    %761 = vmatpush1.msra.mxu0 0.0
    %762 = vmatprep.subr.mxu0 0.0
    %763 = vmatpush1.msra.mxu0 0.0
    %764 = vmatprep.subr.mxu0 0.0
    %765 = vmatpush1.msra.mxu0 0.0
    %766 = vmatprep.subr.mxu0 0.0
    %767 = vmatpush1.msra.mxu0 0.0
    %768 = vmatprep.subr.mxu0 0.0
    %769 = vmatpush1.msra.mxu0 0.0
    %770 = vmatprep.subr.mxu0 0.0
    %771 = vmatpush1.msra.mxu0 0.0
    %772 = vmatprep.subr.mxu0 0.0
    %773 = vmatpush1.msra.mxu0 0.0
    %774 = vmatprep.subr.mxu0 0.0
    %775 = vmatpush1.msra.mxu0 0.0
    %776 = vmatprep.subr.mxu0 0.0
    %777 = vmatpush1.msra.mxu0 0.0
    %778 = vmatprep.subr.mxu0 0.0
    %779 = vmatpush1.msra.mxu0 0.0
    %780 = vmatprep.subr.mxu0 0.0
    %781 = vmatpush1.msra.mxu0 0.0
    %782 = vmatprep.subr.mxu0 0.0
    %783 = vmatpush1.msra.mxu0 0.0
    %784 = vmatprep.subr.mxu0 0.0
    %785 = vmatpush1.msra.mxu0 0.0
    %786 = vmatprep.subr.mxu0 0.0
    %787 = vmatpush1.msra.mxu0 0.0
    %788 = vmatprep.subr.mxu0 0.0
    %789 = vmatpush1.msra.mxu0 0.0
    %790 = vmatprep.subr.mxu0 0.0
    %791 = vmatpush1.msra.mxu0 0.0
    %792 = vmatprep.mubr.f32.mxu0 0.0
    %793 = vmatmul.mubr.f32.gmra.mrb[0].mxu0 %v726
    %v794 = vpop.f32.mrb[0].mxu0
    %v795 = vadd.f32 0.0, %v794
    %v796 = vpop.f32.mrb[0].mxu0
    %797 = vdwg.mxu0
    %v799 = vrot.slane %v795, 6
    %v801 = vadd.f32 %v213, %v799
    %v802 = vtanh.pop %v801
    %v803 = vmul.f32 %v802, 0.5
    %v804 = vadd.f32 %v803, 0.5
    %v806 = vrot.slane %v716, 6
    %v808 = vmul.f32 %v804, %v806
    %810 = vrot.lane.b32.xlu0 %v802, 64
    %v811 = vpop.permute.xlu0 %810
    %v813 = vmul.f32 %v804, %v811
    %815 = vrot.lane.b32.xlu0 %v813, 32
    %v816 = vpop.permute.xlu0 %815
    %v818 = vadd.f32 %v808, %v816
    %v819 = vtanh.pop %v818
    %821 = vrot.lane.b32.xlu0 %v819, 64
    %v822 = vpop.permute.xlu0 %821
    %v824 = vmul.f32 %v804, %v822
    %v826 = vrot.slane %v824, 2
    %827 = vrot.lane.b32.xlu0 %v826, 32
    %v828 = vpop.permute.xlu0 %827
    %v829 = vsel %vm220, %v828, 0
    %831 = vmatprep.subr.mxu0 0.0
    %832 = vmatpush1.msra.mxu0 %v216
    %833 = vmatprep.subr.mxu0 0.0
    %834 = vmatpush1.msra.mxu0 %v217
    %835 = vmatprep.subr.mxu0 0.0
    %836 = vmatpush1.msra.mxu0 %v218
    %837 = vmatprep.subr.mxu0 0.0
    %838 = vmatpush1.msra.mxu0 %v219
    %839 = vmatprep.subr.mxu0 0.0
    %840 = vmatpush1.msra.mxu0 0.0
    %841 = vmatprep.subr.mxu0 0.0
    %842 = vmatpush1.msra.mxu0 0.0
    %843 = vmatprep.subr.mxu0 0.0
    %844 = vmatpush1.msra.mxu0 0.0
    %845 = vmatprep.subr.mxu0 0.0
    %846 = vmatpush1.msra.mxu0 0.0
    %847 = vmatprep.subr.mxu0 0.0
    %848 = vmatpush1.msra.mxu0 0.0
    %849 = vmatprep.subr.mxu0 0.0
    %850 = vmatpush1.msra.mxu0 0.0
    %851 = vmatprep.subr.mxu0 0.0
    %852 = vmatpush1.msra.mxu0 0.0
    %853 = vmatprep.subr.mxu0 0.0
    %854 = vmatpush1.msra.mxu0 0.0
    %855 = vmatprep.subr.mxu0 0.0
    %856 = vmatpush1.msra.mxu0 0.0
    %857 = vmatprep.subr.mxu0 0.0
    %858 = vmatpush1.msra.mxu0 0.0
    %859 = vmatprep.subr.mxu0 0.0
    %860 = vmatpush1.msra.mxu0 0.0
    %861 = vmatprep.subr.mxu0 0.0
    %862 = vmatpush1.msra.mxu0 0.0
    %863 = vmatprep.subr.mxu0 0.0
    %864 = vmatpush1.msra.mxu0 0.0
    %865 = vmatprep.subr.mxu0 0.0
    %866 = vmatpush1.msra.mxu0 0.0
    %867 = vmatprep.subr.mxu0 0.0
    %868 = vmatpush1.msra.mxu0 0.0
    %869 = vmatprep.subr.mxu0 0.0
    %870 = vmatpush1.msra.mxu0 0.0
    %871 = vmatprep.subr.mxu0 0.0
    %872 = vmatpush1.msra.mxu0 0.0
    %873 = vmatprep.subr.mxu0 0.0
    %874 = vmatpush1.msra.mxu0 0.0
    %875 = vmatprep.subr.mxu0 0.0
    %876 = vmatpush1.msra.mxu0 0.0
    %877 = vmatprep.subr.mxu0 0.0
    %878 = vmatpush1.msra.mxu0 0.0
    %879 = vmatprep.subr.mxu0 0.0
    %880 = vmatpush1.msra.mxu0 0.0
    %881 = vmatprep.subr.mxu0 0.0
    %882 = vmatpush1.msra.mxu0 0.0
    %883 = vmatprep.subr.mxu0 0.0
    %884 = vmatpush1.msra.mxu0 0.0
    %885 = vmatprep.subr.mxu0 0.0
    %886 = vmatpush1.msra.mxu0 0.0
    %887 = vmatprep.subr.mxu0 0.0
    %888 = vmatpush1.msra.mxu0 0.0
    %889 = vmatprep.subr.mxu0 0.0
    %890 = vmatpush1.msra.mxu0 0.0
    %891 = vmatprep.subr.mxu0 0.0
    %892 = vmatpush1.msra.mxu0 0.0
    %893 = vmatprep.subr.mxu0 0.0
    %894 = vmatpush1.msra.mxu0 0.0
    %895 = vmatprep.mubr.f32.mxu0 0.0
    %896 = vmatmul.mubr.f32.gmra.mrb[0].mxu0 %v829
    %v897 = vpop.f32.mrb[0].mxu0
    %v898 = vadd.f32 0.0, %v897
    %v899 = vpop.f32.mrb[0].mxu0
    %900 = vdwg.mxu0
    %v902 = vrot.slane %v898, 4
    %v904 = vadd.f32 %v213, %v902
    %v905 = vtanh.pop %v904
    %v906 = vmul.f32 %v905, 0.5
    %v907 = vadd.f32 %v906, 0.5
    %v909 = vrot.slane %v818, 6
    %v911 = vmul.f32 %v907, %v909
    %913 = vrot.lane.b32.xlu0 %v905, 64
    %v914 = vpop.permute.xlu0 %913
    %v916 = vmul.f32 %v907, %v914
    %918 = vrot.lane.b32.xlu0 %v916, 32
    %v919 = vpop.permute.xlu0 %918
    %v921 = vadd.f32 %v911, %v919
    %v922 = vtanh.pop %v921
    %924 = vrot.lane.b32.xlu0 %v922, 64
    %v925 = vpop.permute.xlu0 %924
    %v927 = vmul.f32 %v907, %v925
    %v929 = vrot.slane %v927, 4
    %930 = vrot.lane.b32.xlu0 %v929, 32
    %v931 = vpop.permute.xlu0 %930
    %v932 = vsel %vm220, %v931, 0
    %934 = vmatprep.subr.mxu0 0.0
    %935 = vmatpush1.msra.mxu0 %v216
    %936 = vmatprep.subr.mxu0 0.0
    %937 = vmatpush1.msra.mxu0 %v217
    %938 = vmatprep.subr.mxu0 0.0
    %939 = vmatpush1.msra.mxu0 %v218
    %940 = vmatprep.subr.mxu0 0.0
    %941 = vmatpush1.msra.mxu0 %v219
    %942 = vmatprep.subr.mxu0 0.0
    %943 = vmatpush1.msra.mxu0 0.0
    %944 = vmatprep.subr.mxu0 0.0
    %945 = vmatpush1.msra.mxu0 0.0
    %946 = vmatprep.subr.mxu0 0.0
    %947 = vmatpush1.msra.mxu0 0.0
    %948 = vmatprep.subr.mxu0 0.0
    %949 = vmatpush1.msra.mxu0 0.0
    %950 = vmatprep.subr.mxu0 0.0
    %951 = vmatpush1.msra.mxu0 0.0
    %952 = vmatprep.subr.mxu0 0.0
    %953 = vmatpush1.msra.mxu0 0.0
    %954 = vmatprep.subr.mxu0 0.0
    %955 = vmatpush1.msra.mxu0 0.0
    %956 = vmatprep.subr.mxu0 0.0
    %957 = vmatpush1.msra.mxu0 0.0
    %958 = vmatprep.subr.mxu0 0.0
    %959 = vmatpush1.msra.mxu0 0.0
    %960 = vmatprep.subr.mxu0 0.0
    %961 = vmatpush1.msra.mxu0 0.0
    %962 = vmatprep.subr.mxu0 0.0
    %963 = vmatpush1.msra.mxu0 0.0
    %964 = vmatprep.subr.mxu0 0.0
    %965 = vmatpush1.msra.mxu0 0.0
    %966 = vmatprep.subr.mxu0 0.0
    %967 = vmatpush1.msra.mxu0 0.0
    %968 = vmatprep.subr.mxu0 0.0
    %969 = vmatpush1.msra.mxu0 0.0
    %970 = vmatprep.subr.mxu0 0.0
    %971 = vmatpush1.msra.mxu0 0.0
    %972 = vmatprep.subr.mxu0 0.0
    %973 = vmatpush1.msra.mxu0 0.0
    %974 = vmatprep.subr.mxu0 0.0
    %975 = vmatpush1.msra.mxu0 0.0
    %976 = vmatprep.subr.mxu0 0.0
    %977 = vmatpush1.msra.mxu0 0.0
    %978 = vmatprep.subr.mxu0 0.0
    %979 = vmatpush1.msra.mxu0 0.0
    %980 = vmatprep.subr.mxu0 0.0
    %981 = vmatpush1.msra.mxu0 0.0
    %982 = vmatprep.subr.mxu0 0.0
    %983 = vmatpush1.msra.mxu0 0.0
    %984 = vmatprep.subr.mxu0 0.0
    %985 = vmatpush1.msra.mxu0 0.0
    %986 = vmatprep.subr.mxu0 0.0
    %987 = vmatpush1.msra.mxu0 0.0
    %988 = vmatprep.subr.mxu0 0.0
    %989 = vmatpush1.msra.mxu0 0.0
    %990 = vmatprep.subr.mxu0 0.0
    %991 = vmatpush1.msra.mxu0 0.0
    %992 = vmatprep.subr.mxu0 0.0
    %993 = vmatpush1.msra.mxu0 0.0
    %994 = vmatprep.subr.mxu0 0.0
    %995 = vmatpush1.msra.mxu0 0.0
    %996 = vmatprep.subr.mxu0 0.0
    %997 = vmatpush1.msra.mxu0 0.0
    %998 = vmatprep.mubr.f32.mxu0 0.0
    %999 = vmatmul.mubr.f32.gmra.mrb[0].mxu0 %v932
    %v1000 = vpop.f32.mrb[0].mxu0
    %v1001 = vadd.f32 0.0, %v1000
    %v1002 = vpop.f32.mrb[0].mxu0
    %1003 = vdwg.mxu0
    %v1005 = vrot.slane %v1001, 2
    %v1007 = vadd.f32 %v213, %v1005
    %v1008 = vtanh.pop %v1007
    %v1009 = vmul.f32 %v1008, 0.5
    %v1010 = vadd.f32 %v1009, 0.5
    %v1012 = vrot.slane %v921, 6
    %v1014 = vmul.f32 %v1010, %v1012
    %1016 = vrot.lane.b32.xlu0 %v1008, 64
    %v1017 = vpop.permute.xlu0 %1016
    %v1019 = vmul.f32 %v1010, %v1017
    %1021 = vrot.lane.b32.xlu0 %v1019, 32
    %v1022 = vpop.permute.xlu0 %1021
    %v1024 = vadd.f32 %v1014, %v1022
    %v1025 = vtanh.pop %v1024
    %1027 = vrot.lane.b32.xlu0 %v1025, 64
    %v1028 = vpop.permute.xlu0 %1027
    %v1030 = vmul.f32 %v1010, %v1028
    %v1031 = vld [vmem:[#allocation2 + $0x70] sm:$0xff]
    %v1032 = vld [vmem:[#allocation2 + $0x78] sm:$0xff]
    %v1033 = vld [vmem:[#allocation2 + $0x80] sm:$0xff]
    %v1034 = vld [vmem:[#allocation2 + $0x88] sm:$0xff]
    %v1035 = vld [vmem:[#allocation2 + $0x90] sm:$0xff]
    %v1036 = vld [vmem:[#allocation2 + $0x98] sm:$0xff]
    %v1038 = vrot.slane %v1030, 6
    %1039 = vrot.lane.b32.xlu0 %v1038, 32
    %v1040 = vpop.permute.xlu0 %1039
    %v1041 = vsel %vm220, %v1040, 0
    %1043 = vmatprep.subr.mxu0 0.0
    %1044 = vmatpush1.msra.mxu0 %v1033
    %1045 = vmatprep.subr.mxu0 0.0
    %1046 = vmatpush1.msra.mxu0 %v1034
    %1047 = vmatprep.subr.mxu0 0.0
    %1048 = vmatpush1.msra.mxu0 %v1035
    %1049 = vmatprep.subr.mxu0 0.0
    %1050 = vmatpush1.msra.mxu0 %v1036
    %1051 = vmatprep.subr.mxu0 0.0
    %1052 = vmatpush1.msra.mxu0 0.0
    %1053 = vmatprep.subr.mxu0 0.0
    %1054 = vmatpush1.msra.mxu0 0.0
    %1055 = vmatprep.subr.mxu0 0.0
    %1056 = vmatpush1.msra.mxu0 0.0
    %1057 = vmatprep.subr.mxu0 0.0
    %1058 = vmatpush1.msra.mxu0 0.0
    %1059 = vmatprep.subr.mxu0 0.0
    %1060 = vmatpush1.msra.mxu0 0.0
    %1061 = vmatprep.subr.mxu0 0.0
    %1062 = vmatpush1.msra.mxu0 0.0
    %1063 = vmatprep.subr.mxu0 0.0
    %1064 = vmatpush1.msra.mxu0 0.0
    %1065 = vmatprep.subr.mxu0 0.0
    %1066 = vmatpush1.msra.mxu0 0.0
    %1067 = vmatprep.subr.mxu0 0.0
    %1068 = vmatpush1.msra.mxu0 0.0
    %1069 = vmatprep.subr.mxu0 0.0
    %1070 = vmatpush1.msra.mxu0 0.0
    %1071 = vmatprep.subr.mxu0 0.0
    %1072 = vmatpush1.msra.mxu0 0.0
    %1073 = vmatprep.subr.mxu0 0.0
    %1074 = vmatpush1.msra.mxu0 0.0
    %1075 = vmatprep.subr.mxu0 0.0
    %1076 = vmatpush1.msra.mxu0 0.0
    %1077 = vmatprep.subr.mxu0 0.0
    %1078 = vmatpush1.msra.mxu0 0.0
    %1079 = vmatprep.subr.mxu0 0.0
    %1080 = vmatpush1.msra.mxu0 0.0
    %1081 = vmatprep.subr.mxu0 0.0
    %1082 = vmatpush1.msra.mxu0 0.0
    %1083 = vmatprep.subr.mxu0 0.0
    %1084 = vmatpush1.msra.mxu0 0.0
    %1085 = vmatprep.subr.mxu0 0.0
    %1086 = vmatpush1.msra.mxu0 0.0
    %1087 = vmatprep.subr.mxu0 0.0
    %1088 = vmatpush1.msra.mxu0 0.0
    %1089 = vmatprep.subr.mxu0 0.0
    %1090 = vmatpush1.msra.mxu0 0.0
    %1091 = vmatprep.subr.mxu0 0.0
    %1092 = vmatpush1.msra.mxu0 0.0
    %1093 = vmatprep.subr.mxu0 0.0
    %1094 = vmatpush1.msra.mxu0 0.0
    %1095 = vmatprep.subr.mxu0 0.0
    %1096 = vmatpush1.msra.mxu0 0.0
    %1097 = vmatprep.subr.mxu0 0.0
    %1098 = vmatpush1.msra.mxu0 0.0
    %1099 = vmatprep.subr.mxu0 0.0
    %1100 = vmatpush1.msra.mxu0 0.0
    %1101 = vmatprep.subr.mxu0 0.0
    %1102 = vmatpush1.msra.mxu0 0.0
    %1103 = vmatprep.subr.mxu0 0.0
    %1104 = vmatpush1.msra.mxu0 0.0
    %1105 = vmatprep.subr.mxu0 0.0
    %1106 = vmatpush1.msra.mxu0 0.0
    %1107 = vmatprep.mubr.f32.mxu0 0.0
    %1108 = vmatmul.mubr.f32.gmra.mrb[0].mxu0 %v1041
    %v1109 = vpop.f32.mrb[0].mxu0
    %v1110 = vadd.f32 0.0, %v1109
    %v1111 = vpop.f32.mrb[0].mxu0
    %1112 = vdwg.mxu0
    %1113 = vmatprep.subr.mxu0 0.0
    %1114 = vmatpush1.msra.mxu0 %v1031
    %1115 = vmatprep.subr.mxu0 0.0
    %1116 = vmatpush1.msra.mxu0 %v1032
    %1117 = vmatprep.subr.mxu0 0.0
    %1118 = vmatpush1.msra.mxu0 0.0
    %1119 = vmatprep.subr.mxu0 0.0
    %1120 = vmatpush1.msra.mxu0 0.0
    %1121 = vmatprep.subr.mxu0 0.0
    %1122 = vmatpush1.msra.mxu0 0.0
    %1123 = vmatprep.subr.mxu0 0.0
    %1124 = vmatpush1.msra.mxu0 0.0
    %1125 = vmatprep.subr.mxu0 0.0
    %1126 = vmatpush1.msra.mxu0 0.0
    %1127 = vmatprep.subr.mxu0 0.0
    %1128 = vmatpush1.msra.mxu0 0.0
    %1129 = vmatprep.subr.mxu0 0.0
    %1130 = vmatpush1.msra.mxu0 0.0
    %1131 = vmatprep.subr.mxu0 0.0
    %1132 = vmatpush1.msra.mxu0 0.0
    %1133 = vmatprep.subr.mxu0 0.0
    %1134 = vmatpush1.msra.mxu0 0.0
    %1135 = vmatprep.subr.mxu0 0.0
    %1136 = vmatpush1.msra.mxu0 0.0
    %1137 = vmatprep.subr.mxu0 0.0
    %1138 = vmatpush1.msra.mxu0 0.0
    %1139 = vmatprep.subr.mxu0 0.0
    %1140 = vmatpush1.msra.mxu0 0.0
    %1141 = vmatprep.subr.mxu0 0.0
    %1142 = vmatpush1.msra.mxu0 0.0
    %1143 = vmatprep.subr.mxu0 0.0
    %1144 = vmatpush1.msra.mxu0 0.0
    %1145 = vmatprep.subr.mxu0 0.0
    %1146 = vmatpush1.msra.mxu0 0.0
    %1147 = vmatprep.subr.mxu0 0.0
    %1148 = vmatpush1.msra.mxu0 0.0
    %1149 = vmatprep.subr.mxu0 0.0
    %1150 = vmatpush1.msra.mxu0 0.0
    %1151 = vmatprep.subr.mxu0 0.0
    %1152 = vmatpush1.msra.mxu0 0.0
    %1153 = vmatprep.subr.mxu0 0.0
    %1154 = vmatpush1.msra.mxu0 0.0
    %1155 = vmatprep.subr.mxu0 0.0
    %1156 = vmatpush1.msra.mxu0 0.0
    %1157 = vmatprep.subr.mxu0 0.0
    %1158 = vmatpush1.msra.mxu0 0.0
    %1159 = vmatprep.subr.mxu0 0.0
    %1160 = vmatpush1.msra.mxu0 0.0
    %1161 = vmatprep.subr.mxu0 0.0
    %1162 = vmatpush1.msra.mxu0 0.0
    %1163 = vmatprep.subr.mxu0 0.0
    %1164 = vmatpush1.msra.mxu0 0.0
    %1165 = vmatprep.subr.mxu0 0.0
    %1166 = vmatpush1.msra.mxu0 0.0
    %1167 = vmatprep.subr.mxu0 0.0
    %1168 = vmatpush1.msra.mxu0 0.0
    %1169 = vmatprep.subr.mxu0 0.0
    %1170 = vmatpush1.msra.mxu0 0.0
    %1171 = vmatprep.subr.mxu0 0.0
    %1172 = vmatpush1.msra.mxu0 0.0
    %1173 = vmatprep.subr.mxu0 0.0
    %1174 = vmatpush1.msra.mxu0 0.0
    %1175 = vmatprep.subr.mxu0 0.0
    %1176 = vmatpush1.msra.mxu0 0.0
    %1177 = vmatprep.mubr.f32.mxu0 0.0
    %1178 = vmatmul.mubr.f32.gmra.mrb[0].mxu0 %v40
    %v1179 = vpop.f32.mrb[0].mxu0
    %v1180 = vadd.f32 %v1110, %v1179
    %v1181 = vpop.f32.mrb[0].mxu0
    %1182 = vdwg.mxu0
    %v1183 = vlaneseq
    %v1184 = vshrl.u32 %v1183, 7
    %v1185 = vsub.s32 0, %v1184
    %v1186 = vrot.slane %v29, %v1185
    %v1187 = vadd.f32 %v1180, %v1186
    %v1188 = vmax.f32 %v1187, 0.0
    %v1189 = vlaneseq
    %v1190 = vshrl.u32 %v1189, 7
    %v1191 = vsub.s32 0, %v1190
    %v1192 = vrot.slane %v30, %v1191
    %v1193 = vmul.f32 %v1188, %v1192
    %vm1194 = vcmask 1041408
    %v1195 = vsel %vm1194, %v1193, 0.0
    %1196 = vadd.xlane.f32.xlu0 %v1195
    %v1197 = vpop.xlane.xlu0 %1196
    %v1198 = vlaneseq
    %v1199 = vshrl.u32 %v1198, 7
    %v1200 = vsub.s32 0, %v1199
    %v1201 = vrot.slane %v31, %v1200
    %v1202 = vadd.f32 %v1197, %v1201
    %1203 = vst [vmem:[%s2] sm:$0x3] %v1202
    // Predicated region
    $region14: #{value_network2_forward.1} parent=1 // pred_check
      _
    $region15: #{value_network2_forward.1} parent=1 // pred_check_branch
      %1205 = sbr.rel (0) target = $region17
    $region16: #{value_network2_forward.1} parent=1 // pred_region
      _
    $region17: #{value_network2_forward.1} parent=1 // pred_fallthru
      _
    // Predicated region
    $region18: #{value_network2_forward.1} parent=1 // pred_check
      _
    $region19: #{value_network2_forward.1} parent=1 // pred_check_branch
      %1207 = sbr.rel (0) target = $region21
    $region20: #{value_network2_forward.1} parent=1 // pred_region
      _
    $region21: #{value_network2_forward.1} parent=1 // pred_fallthru
      _
    %1208 = vsyncpa [#allocation3], 1

</llo_original>
